<compile_context>
chip_gen: v7x
topology: tpu7x:2x2x1
jax: 0.10.0
libtpu: 0.0.40
codegen_flags: <defaults>
</compile_context>

<pallas_src>
import functools

import jax
import jax.numpy as jnp
from jax.experimental import pallas as pl
from jax.experimental.pallas import tpu as pltpu


# ---------------------------------------------------------------------------
# One-time parameter preparation (kept OUT of the per-step forward).
# ---------------------------------------------------------------------------
def prepare_params(params, *, recurrent_dtype=jnp.float32,
                   out_weight_dtype=jnp.bfloat16):
    """Pre-transpose / pre-cast / pre-fold weights once.

    recurrent_dtype: pass jnp.bfloat16 for large H (>= ~512) -- halves W_hh
    VMEM/DMA footprint (needed to fit v7x's smaller VMEM at H >= ~1.5k) while
    accumulation stays fp32.  Demo uses fp32 (H=32) for a tight state check.
    """
    H = params["w_hh"].shape[1]
    w_ih, w_hh = params["w_ih"], params["w_hh"]
    b_ih, b_hh = params["b_ih"], params["b_hh"]

    # (C_in, 3H) row-gather table: one_hot(idx) @ W_ih^T == row idx of W_ih^T.
    wih_t = jnp.transpose(w_ih).astype(jnp.float32)

    # (H, 3H) recurrent weight for a single fused hidden-path matmul.
    whh_t = jnp.transpose(w_hh).astype(recurrent_dtype)

    # Fold b_ih_r + b_hh_r and b_ih_z + b_hh_z offline; the n-gate hidden bias
    # must stay separate because of the r * (W_hn h + b_hn) term.
    b_i3 = jnp.concatenate([b_ih[:2 * H] + b_hh[:2 * H], b_ih[2 * H:]])
    b_i3 = b_i3.reshape(1, 3 * H).astype(jnp.float32)
    b_hn = b_hh[2 * H:].reshape(1, H).astype(jnp.float32)

    # Output projection: transposed + cast ONCE, not per forward call.
    wout_t = jnp.transpose(params["w_out"]).astype(out_weight_dtype)  # (H, C_out)
    b_out = params["b_out"].reshape(1, -1).astype(jnp.float32)

    return {"wih_t": wih_t, "whh_t": whh_t, "b_i3": b_i3, "b_hn": b_hn,
            "wout_t": wout_t, "b_out": b_out}


# ---------------------------------------------------------------------------
# Kernel A: single-timestep GRU cell with HBM row-gather of W_ih^T.
# ---------------------------------------------------------------------------
def gru_cell_kernel(idx_ref, h_ref, wih_t_hbm, whh_ref, b_i3_ref, b_hn_ref,
                    hnew_ref, hbf_ref, gi_sc, sem):
    B, H = h_ref.shape
    C_in = wih_t_hbm.shape[0]

    # 1) One (1, 3H) row DMA per batch element, gathered straight from HBM
    #    into a single (B, 3H) scratch.  Start all, overlap with the hidden
    #    matmul, wait all (signals/waits on the shared sem stay matched).
    #    TODO(synk): switch to pl.loop(start+wait) for B >= ~64 (code size).
    copies = []
    for b in range(B):
        # TODO(synk): out-of-range ids are clipped and fetch a real row;
        #             the reference one-hot would produce an all-zero input.
        i = jnp.clip(idx_ref[b], 0, C_in - 1)
        cp = pltpu.make_async_copy(wih_t_hbm.at[pl.ds(i, 1), :],
                                   gi_sc.at[pl.ds(b, 1), :],
                                   sem.at[0])
        cp.start()
        copies.append(cp)

    # 2) Hidden path: one fused (B,H)@(H,3H) MXU matmul, fp32 accumulation.
    h = h_ref[...]
    gh3 = jnp.dot(h.astype(whh_ref.dtype), whh_ref[...],
                  preferred_element_type=jnp.float32)          # (B, 3H)

    # 3) Finish the cell (PyTorch gate order [r, z, n]).
    for cp in copies:
        cp.wait()
    gi3 = gi_sc[...] + b_i3_ref[...]                            # folded biases
    r = jax.nn.sigmoid(gi3[:, 0:H] + gh3[:, 0:H])
    z = jax.nn.sigmoid(gi3[:, H:2 * H] + gh3[:, H:2 * H])
    n = jnp.tanh(gi3[:, 2 * H:3 * H] + r * (gh3[:, 2 * H:3 * H] + b_hn_ref[...]))
    h_new = (1.0 - z) * n + z * h

    hnew_ref[...] = h_new
    hbf_ref[...] = h_new.astype(hbf_ref.dtype)   # hoisted cast for kernel B


# ---------------------------------------------------------------------------
# Kernel B: logit = tanh(h_new @ W_out^T + b_out), tiled over the catalog.
# ---------------------------------------------------------------------------
def h2o_kernel(h_ref, wout_ref, bout_ref, logit_ref):
    acc = jnp.dot(h_ref[...], wout_ref[...], preferred_element_type=jnp.float32)
    logit_ref[...] = jnp.tanh(acc + bout_ref[...])   # final_act == 'tanh'


def _pick_tn(H, C_out, w_itemsize, target_tile_bytes=4 << 20):
    """Catalog tile width: ~4 MiB of streamed weights per buffer (amortizes
    per-grid-step overhead on 0.8-3.2 TB/s HBM), capped so the grid has >= 2
    steps so both v7x TensorCores split the catalog under 'parallel'."""
    tn = max(128, (target_tile_bytes // (w_itemsize * H)) // 128 * 128)
    if C_out >= 256:
        tn = min(tn, max(128, (C_out // 2) // 128 * 128))
    return min(tn, C_out)


# ---------------------------------------------------------------------------
# Forward wrapper (hot path -- no weight re-layout happens here).
# ---------------------------------------------------------------------------
@functools.partial(jax.jit, static_argnames=("tn",))
def gru4rec_forward(item_idx, hidden, prepped, *, tn=None):
    """item_idx (B,) int32, hidden (1,B,H) -> (logit (B,C_out), hidden (1,B,H))."""
    B = item_idx.shape[0]
    H = prepped["whh_t"].shape[0]
    C_out = prepped["wout_t"].shape[1]

    h0 = hidden[0].astype(jnp.float32)          # (B, H)
    idx = item_idx.astype(jnp.int32)

    vmem = pl.BlockSpec(memory_space=pltpu.MemorySpace.VMEM)
    smem = pl.BlockSpec(memory_space=pltpu.MemorySpace.SMEM)
    hbm = pl.BlockSpec(memory_space=pl.ANY)

    # --- Kernel A: GRU cell (h updated in place; also emits bf16 h) ---
    h_new, h_bf = pl.pallas_call(
        gru_cell_kernel,
        out_shape=(jax.ShapeDtypeStruct((B, H), jnp.float32),
                   jax.ShapeDtypeStruct((B, H), jnp.bfloat16)),
        in_specs=[smem, vmem, hbm, vmem, vmem, vmem],
        out_specs=(vmem, vmem),
        scratch_shapes=[
            pltpu.VMEM((B, 3 * H), jnp.float32),   # gathered W_ih^T rows
            pltpu.SemaphoreType.DMA((1,)),
        ],
        input_output_aliases={1: 0},               # h0 -> h_new in place
    )(idx, h0, prepped["wih_t"], prepped["whh_t"],
      prepped["b_i3"], prepped["b_hn"])

    # dropout_input / dropout_hidden are identity in eval mode.

    # --- Kernel B: logits streamed over the item catalog ---
    w_itemsize = prepped["wout_t"].dtype.itemsize
    if tn is None:
        tn = _pick_tn(H, C_out, w_itemsize)
    tn = min(tn, C_out)   # multiple of 128, or equal to full C_out

    # Double-buffered weight + bias + output tiles, plus resident h, + headroom.
    vmem_limit = min(
        48 * 1024 * 1024,
        max(16 * 1024 * 1024,
            2 * (w_itemsize * H * tn) + 2 * (4 * tn) + 2 * (4 * B * tn)
            + 2 * (2 * B * H) + (4 << 20)))

    logit = pl.pallas_call(
        h2o_kernel,
        out_shape=jax.ShapeDtypeStruct((B, C_out), jnp.float32),
        grid=(pl.cdiv(C_out, tn),),
        in_specs=[
            pl.BlockSpec((B, H), lambda j: (0, 0)),      # bf16 h, resident
            pl.BlockSpec((H, tn), lambda j: (0, j)),     # streamed bf16 weights
            pl.BlockSpec((1, tn), lambda j: (0, j)),     # bias tile
        ],
        out_specs=pl.BlockSpec((B, tn), lambda j: (0, j)),   # lane-dense output
        compiler_params=pltpu.CompilerParams(
            dimension_semantics=("parallel",),           # v7x: 2 TCs split catalog
            vmem_limit_bytes=int(vmem_limit)),
    )(h_bf, prepped["wout_t"], prepped["b_out"])

    return logit, h_new[None, :, :]


# ---------------------------------------------------------------------------
# Reference / init / demo
# ---------------------------------------------------------------------------
def init_params(key, input_size, hidden_size, output_size):
    """Deterministic init matching the PyTorch parameter shapes (uniform +-1/sqrt(H))."""
    ks = jax.random.split(key, 6)
    s = 1.0 / jnp.sqrt(jnp.float32(hidden_size))
    u = lambda k, shape: jax.random.uniform(k, shape, jnp.float32, -s, s)
    return {
        "w_ih": u(ks[0], (3 * hidden_size, input_size)),   # gru.weight_ih_l0
        "w_hh": u(ks[1], (3 * hidden_size, hidden_size)),  # gru.weight_hh_l0
        "b_ih": u(ks[2], (3 * hidden_size,)),              # gru.bias_ih_l0
        "b_hh": u(ks[3], (3 * hidden_size,)),              # gru.bias_hh_l0
        "w_out": u(ks[4], (output_size, hidden_size)),     # h2o.weight
        "b_out": u(ks[5], (output_size,)),                 # h2o.bias
    }


def reference_forward(item_idx, hidden, params):
    """Pure-JAX fp32 reference of the same forward pass, for verification."""
    H = params["w_hh"].shape[1]
    C_in = params["w_ih"].shape[1]
    hp = jax.lax.Precision.HIGHEST
    x = jax.nn.one_hot(item_idx, C_in, dtype=jnp.float32)
    h = hidden[0]
    gi = jnp.dot(x, params["w_ih"].T, precision=hp) + params["b_ih"]
    gh = jnp.dot(h, params["w_hh"].T, precision=hp) + params["b_hh"]
    r = jax.nn.sigmoid(gi[:, :H] + gh[:, :H])
    z = jax.nn.sigmoid(gi[:, H:2 * H] + gh[:, H:2 * H])
    n = jnp.tanh(gi[:, 2 * H:] + r * gh[:, 2 * H:])
    h_new = (1.0 - z) * n + z * h
    logit = jnp.tanh(jnp.dot(h_new, params["w_out"].T, precision=hp)
                     + params["b_out"])
    return logit, h_new[None]


if __name__ == "__main__":
    input_size = 512     # item catalog size (GRU4REC: input_size == output_size)
    output_size = 512
    hidden_size = 32
    batch_size = 8
    num_layers = 1

    key = jax.random.PRNGKey(0)
    k_param, k_idx, k_hid = jax.random.split(key, 3)

    params = init_params(k_param, input_size, hidden_size, output_size)
    item_idx = jax.random.randint(k_idx, (batch_size,), 0, input_size, dtype=jnp.int32)
    hidden = jax.random.normal(k_hid, (num_layers, batch_size, hidden_size), jnp.float32)

    # reference first (fp32, pure JAX, highest-precision matmuls)
    ref_logit, ref_hidden = reference_forward(item_idx, hidden, params)

    # one-time weight layout prep (deliberately OUTSIDE the per-step forward)
    prepped = prepare_params(params)
    prepped = jax.tree_util.tree_map(jax.block_until_ready, prepped)

    logit, hidden_new = gru4rec_forward(item_idx, hidden, prepped)
    jax.block_until_ready((logit, hidden_new))

    assert logit.shape == (batch_size, output_size)
    assert hidden_new.shape == (num_layers, batch_size, hidden_size)
    # Recurrence runs with fp32 state / fp32 accumulation.
    assert jnp.allclose(hidden_new, ref_hidden, atol=5e-3, rtol=1e-3), \
        float(jnp.max(jnp.abs(hidden_new - ref_hidden)))
    # Output projection streams bf16 weights -> looser check on logits.
    assert jnp.allclose(logit, ref_logit, atol=2e-2, rtol=2e-2), \
        float(jnp.max(jnp.abs(logit - ref_logit)))

    print("KERNEL_OK")
</pallas_src>

<mosaic_0001>
module attributes {stable_mosaic.version = 11 : i64} {
  func.func @h2o_kernel(%arg0: i32, %arg1: memref<8x32xbf16, #tpu.memory_space<vmem>>, %arg2: memref<32x256xbf16, #tpu.memory_space<vmem>>, %arg3: memref<1x256xf32, #tpu.memory_space<vmem>>, %arg4: memref<8x256xf32, #tpu.memory_space<vmem>>) attributes {dimension_semantics = [#tpu.dimension_semantics<parallel>], iteration_bounds = array<i64: 2>, scalar_prefetch = 0 : i64, scratch_operands = 0 : i64, tpu.core_type = #tpu.core_type<tc>, window_params = [{pipeline_mode = #tpu.pipeline_mode<synchronous>, transform_indices = @transform_0, window_bounds = array<i64: 8, 32>}, {transform_indices = @transform_1, window_bounds = array<i64: 32, 256>}, {transform_indices = @transform_2, window_bounds = array<i64: 1, 256>}, {transform_indices = @transform_3, window_bounds = array<i64: 8, 256>}]} {
    %c0 = arith.constant 0 : index
    %c0_0 = arith.constant 0 : index
    %0 = vector.load %arg1[%c0, %c0_0] : memref<8x32xbf16, #tpu.memory_space<vmem>>, vector<8x32xbf16>
    %c0_1 = arith.constant 0 : index
    %c0_2 = arith.constant 0 : index
    %1 = vector.load %arg2[%c0_1, %c0_2] : memref<32x256xbf16, #tpu.memory_space<vmem>>, vector<32x256xbf16>
    %cst = arith.constant dense<0.000000e+00> : vector<8x256xf32>
    %2 = tpu.matmul %0, %1, %cst {dimension_numbers = #tpu.dot_dimension_numbers<[1], [0], [0], [1], [0, 0, 1, 1], [], []>} : vector<8x32xbf16>, vector<32x256xbf16>, vector<8x256xf32> -> vector<8x256xf32>
    %c0_3 = arith.constant 0 : index
    %c0_4 = arith.constant 0 : index
    %3 = vector.load %arg3[%c0_3, %c0_4] : memref<1x256xf32, #tpu.memory_space<vmem>>, vector<1x256xf32>
    %4 = vector.broadcast %3 : vector<1x256xf32> to vector<8x256xf32>
    %5 = arith.addf %2, %4 : vector<8x256xf32>
    %6 = math.tanh %5 : vector<8x256xf32>
    %c0_5 = arith.constant 0 : index
    %c0_6 = arith.constant 0 : index
    %7 = vector.load %arg4[%c0_5, %c0_6] : memref<8x256xf32, #tpu.memory_space<vmem>>, vector<8x256xf32>
    tpu.vector_store %arg4[%c0_5, %c0_6], %6 {strides = array<i32>} : memref<8x256xf32, #tpu.memory_space<vmem>>, vector<8x256xf32>,
    return
  }
  func.func @transform_0(%arg0: i32) -> (i32, i32) {
    %c0_i32 = arith.constant 0 : i32
    %c0_i32_0 = arith.constant 0 : i32
    %c0_i32_1 = arith.constant 0 : i32
    return %c0_i32, %c0_i32_0 : i32, i32
  }
  func.func @transform_1(%arg0: i32) -> (i32, i32) {
    %c0_i32 = arith.constant 0 : i32
    %c0_i32_0 = arith.constant 0 : i32
    return %c0_i32, %arg0 : i32, i32
  }
  func.func @transform_2(%arg0: i32) -> (i32, i32) {
    %c0_i32 = arith.constant 0 : i32
    %c0_i32_0 = arith.constant 0 : i32
    return %c0_i32, %arg0 : i32, i32
  }
  func.func @transform_3(%arg0: i32) -> (i32, i32) {
    %c0_i32 = arith.constant 0 : i32
    %c0_i32_0 = arith.constant 0 : i32
    return %c0_i32, %arg0 : i32, i32
  }
}

module attributes {stable_mosaic.version = 11 : i64} {
  func.func @gru_cell_kernel(%arg0: memref<8xi32, #tpu.memory_space<smem>>, %arg1: memref<8x32xf32, #tpu.memory_space<vmem>>, %arg2: memref<512x96xf32, #tpu.memory_space<any>>, %arg3: memref<32x96xf32, #tpu.memory_space<vmem>>, %arg4: memref<1x96xf32, #tpu.memory_space<vmem>>, %arg5: memref<1x32xf32, #tpu.memory_space<vmem>>, %arg6: memref<8x32xf32, #tpu.memory_space<vmem>>, %arg7: memref<8x32xbf16, #tpu.memory_space<vmem>>, %arg8: memref<8x96xf32, #tpu.memory_space<vmem>>, %arg9: memref<1x!tpu.dma_semaphore, #tpu.memory_space<semaphore_mem>>) attributes {dimension_semantics = [], scalar_prefetch = 0 : i64, scratch_operands = 2 : i64, tpu.core_type = #tpu.core_type<tc>} {
    %c0 = arith.constant 0 : index
    %0 = memref.load %arg0[%c0] : memref<8xi32, #tpu.memory_space<smem>>
    %c0_i32 = arith.constant 0 : i32
    %c511_i32 = arith.constant 511 : i32
    %1 = arith.maxsi %c0_i32, %0 : i32
    %2 = arith.minsi %c511_i32, %1 : i32
    %c0_i32_0 = arith.constant 0 : i32
    %c0_i32_1 = arith.constant 0 : i32
    %3 = tpu.memref_slice %arg2[%2, %c0_i32_1] : memref<512x96xf32, #tpu.memory_space<any>> -> memref<1x96xf32, #tpu.memory_space<any>>
    %c0_i32_2 = arith.constant 0 : i32
    %c0_i32_3 = arith.constant 0 : i32
    %4 = tpu.memref_slice %arg8[%c0_i32_2, %c0_i32_3] : memref<8x96xf32, #tpu.memory_space<vmem>> -> memref<1x96xf32, #tpu.memory_space<vmem>>
    %5 = tpu.memref_slice %arg9[%c0_i32_0] : memref<1x!tpu.dma_semaphore, #tpu.memory_space<semaphore_mem>> -> memref<1x!tpu.dma_semaphore, #tpu.memory_space<semaphore_mem>>
    %6 = tpu.memref_squeeze %5 : memref<1x!tpu.dma_semaphore, #tpu.memory_space<semaphore_mem>> -> memref<!tpu.dma_semaphore, #tpu.memory_space<semaphore_mem>>
    tpu.enqueue_dma source(%3 : memref<1x96xf32, #tpu.memory_space<any>>) target(%4 : memref<1x96xf32, #tpu.memory_space<vmem>>) target_semaphore(%6 : memref<!tpu.dma_semaphore, #tpu.memory_space<semaphore_mem>>)
    %c1 = arith.constant 1 : index
    %7 = memref.load %arg0[%c1] : memref<8xi32, #tpu.memory_space<smem>>
    %c0_i32_4 = arith.constant 0 : i32
    %c511_i32_5 = arith.constant 511 : i32
    %8 = arith.maxsi %c0_i32_4, %7 : i32
    %9 = arith.minsi %c511_i32_5, %8 : i32
    %c0_i32_6 = arith.constant 0 : i32
    %c0_i32_7 = arith.constant 0 : i32
    %10 = tpu.memref_slice %arg2[%9, %c0_i32_7] : memref<512x96xf32, #tpu.memory_space<any>> -> memref<1x96xf32, #tpu.memory_space<any>>
    %c1_i32 = arith.constant 1 : i32
    %c0_i32_8 = arith.constant 0 : i32
    %11 = tpu.memref_slice %arg8[%c1_i32, %c0_i32_8] : memref<8x96xf32, #tpu.memory_space<vmem>> -> memref<1x96xf32, #tpu.memory_space<vmem>>
    %12 = tpu.memref_slice %arg9[%c0_i32_6] : memref<1x!tpu.dma_semaphore, #tpu.memory_space<semaphore_mem>> -> memref<1x!tpu.dma_semaphore, #tpu.memory_space<semaphore_mem>>
    %13 = tpu.memref_squeeze %12 : memref<1x!tpu.dma_semaphore, #tpu.memory_space<semaphore_mem>> -> memref<!tpu.dma_semaphore, #tpu.memory_space<semaphore_mem>>
    tpu.enqueue_dma source(%10 : memref<1x96xf32, #tpu.memory_space<any>>) target(%11 : memref<1x96xf32, #tpu.memory_space<vmem>>) target_semaphore(%13 : memref<!tpu.dma_semaphore, #tpu.memory_space<semaphore_mem>>)
    %c2 = arith.constant 2 : index
    %14 = memref.load %arg0[%c2] : memref<8xi32, #tpu.memory_space<smem>>
    %c0_i32_9 = arith.constant 0 : i32
    %c511_i32_10 = arith.constant 511 : i32
    %15 = arith.maxsi %c0_i32_9, %14 : i32
    %16 = arith.minsi %c511_i32_10, %15 : i32
    %c0_i32_11 = arith.constant 0 : i32
    %c0_i32_12 = arith.constant 0 : i32
    %17 = tpu.memref_slice %arg2[%16, %c0_i32_12] : memref<512x96xf32, #tpu.memory_space<any>> -> memref<1x96xf32, #tpu.memory_space<any>>
    %c2_i32 = arith.constant 2 : i32
    %c0_i32_13 = arith.constant 0 : i32
    %18 = tpu.memref_slice %arg8[%c2_i32, %c0_i32_13] : memref<8x96xf32, #tpu.memory_space<vmem>> -> memref<1x96xf32, #tpu.memory_space<vmem>>
    %19 = tpu.memref_slice %arg9[%c0_i32_11] : memref<1x!tpu.dma_semaphore, #tpu.memory_space<semaphore_mem>> -> memref<1x!tpu.dma_semaphore, #tpu.memory_space<semaphore_mem>>
    %20 = tpu.memref_squeeze %19 : memref<1x!tpu.dma_semaphore, #tpu.memory_space<semaphore_mem>> -> memref<!tpu.dma_semaphore, #tpu.memory_space<semaphore_mem>>
    tpu.enqueue_dma source(%17 : memref<1x96xf32, #tpu.memory_space<any>>) target(%18 : memref<1x96xf32, #tpu.memory_space<vmem>>) target_semaphore(%20 : memref<!tpu.dma_semaphore, #tpu.memory_space<semaphore_mem>>)
    %c3 = arith.constant 3 : index
    %21 = memref.load %arg0[%c3] : memref<8xi32, #tpu.memory_space<smem>>
    %c0_i32_14 = arith.constant 0 : i32
    %c511_i32_15 = arith.constant 511 : i32
    %22 = arith.maxsi %c0_i32_14, %21 : i32
    %23 = arith.minsi %c511_i32_15, %22 : i32
    %c0_i32_16 = arith.constant 0 : i32
    %c0_i32_17 = arith.constant 0 : i32
    %24 = tpu.memref_slice %arg2[%23, %c0_i32_17] : memref<512x96xf32, #tpu.memory_space<any>> -> memref<1x96xf32, #tpu.memory_space<any>>
    %c3_i32 = arith.constant 3 : i32
    %c0_i32_18 = arith.constant 0 : i32
    %25 = tpu.memref_slice %arg8[%c3_i32, %c0_i32_18] : memref<8x96xf32, #tpu.memory_space<vmem>> -> memref<1x96xf32, #tpu.memory_space<vmem>>
    %26 = tpu.memref_slice %arg9[%c0_i32_16] : memref<1x!tpu.dma_semaphore, #tpu.memory_space<semaphore_mem>> -> memref<1x!tpu.dma_semaphore, #tpu.memory_space<semaphore_mem>>
    %27 = tpu.memref_squeeze %26 : memref<1x!tpu.dma_semaphore, #tpu.memory_space<semaphore_mem>> -> memref<!tpu.dma_semaphore, #tpu.memory_space<semaphore_mem>>
    tpu.enqueue_dma source(%24 : memref<1x96xf32, #tpu.memory_space<any>>) target(%25 : memref<1x96xf32, #tpu.memory_space<vmem>>) target_semaphore(%27 : memref<!tpu.dma_semaphore, #tpu.memory_space<semaphore_mem>>)
    %c4 = arith.constant 4 : index
    %28 = memref.load %arg0[%c4] : memref<8xi32, #tpu.memory_space<smem>>
    %c0_i32_19 = arith.constant 0 : i32
    %c511_i32_20 = arith.constant 511 : i32
    %29 = arith.maxsi %c0_i32_19, %28 : i32
    %30 = arith.minsi %c511_i32_20, %29 : i32
    %c0_i32_21 = arith.constant 0 : i32
    %c0_i32_22 = arith.constant 0 : i32
    %31 = tpu.memref_slice %arg2[%30, %c0_i32_22] : memref<512x96xf32, #tpu.memory_space<any>> -> memref<1x96xf32, #tpu.memory_space<any>>
    %c4_i32 = arith.constant 4 : i32
    %c0_i32_23 = arith.constant 0 : i32
    %32 = tpu.memref_slice %arg8[%c4_i32, %c0_i32_23] : memref<8x96xf32, #tpu.memory_space<vmem>> -> memref<1x96xf32, #tpu.memory_space<vmem>>
    %33 = tpu.memref_slice %arg9[%c0_i32_21] : memref<1x!tpu.dma_semaphore, #tpu.memory_space<semaphore_mem>> -> memref<1x!tpu.dma_semaphore, #tpu.memory_space<semaphore_mem>>
    %34 = tpu.memref_squeeze %33 : memref<1x!tpu.dma_semaphore, #tpu.memory_space<semaphore_mem>> -> memref<!tpu.dma_semaphore, #tpu.memory_space<semaphore_mem>>
    tpu.enqueue_dma source(%31 : memref<1x96xf32, #tpu.memory_space<any>>) target(%32 : memref<1x96xf32, #tpu.memory_space<vmem>>) target_semaphore(%34 : memref<!tpu.dma_semaphore, #tpu.memory_space<semaphore_mem>>)
    %c5 = arith.constant 5 : index
    %35 = memref.load %arg0[%c5] : memref<8xi32, #tpu.memory_space<smem>>
    %c0_i32_24 = arith.constant 0 : i32
    %c511_i32_25 = arith.constant 511 : i32
    %36 = arith.maxsi %c0_i32_24, %35 : i32
    %37 = arith.minsi %c511_i32_25, %36 : i32
    %c0_i32_26 = arith.constant 0 : i32
    %c0_i32_27 = arith.constant 0 : i32
    %38 = tpu.memref_slice %arg2[%37, %c0_i32_27] : memref<512x96xf32, #tpu.memory_space<any>> -> memref<1x96xf32, #tpu.memory_space<any>>
    %c5_i32 = arith.constant 5 : i32
    %c0_i32_28 = arith.constant 0 : i32
    %39 = tpu.memref_slice %arg8[%c5_i32, %c0_i32_28] : memref<8x96xf32, #tpu.memory_space<vmem>> -> memref<1x96xf32, #tpu.memory_space<vmem>>
    %40 = tpu.memref_slice %arg9[%c0_i32_26] : memref<1x!tpu.dma_semaphore, #tpu.memory_space<semaphore_mem>> -> memref<1x!tpu.dma_semaphore, #tpu.memory_space<semaphore_mem>>
    %41 = tpu.memref_squeeze %40 : memref<1x!tpu.dma_semaphore, #tpu.memory_space<semaphore_mem>> -> memref<!tpu.dma_semaphore, #tpu.memory_space<semaphore_mem>>
    tpu.enqueue_dma source(%38 : memref<1x96xf32, #tpu.memory_space<any>>) target(%39 : memref<1x96xf32, #tpu.memory_space<vmem>>) target_semaphore(%41 : memref<!tpu.dma_semaphore, #tpu.memory_space<semaphore_mem>>)
    %c6 = arith.constant 6 : index
    %42 = memref.load %arg0[%c6] : memref<8xi32, #tpu.memory_space<smem>>
    %c0_i32_29 = arith.constant 0 : i32
    %c511_i32_30 = arith.constant 511 : i32
    %43 = arith.maxsi %c0_i32_29, %42 : i32
    %44 = arith.minsi %c511_i32_30, %43 : i32
    %c0_i32_31 = arith.constant 0 : i32
    %c0_i32_32 = arith.constant 0 : i32
    %45 = tpu.memref_slice %arg2[%44, %c0_i32_32] : memref<512x96xf32, #tpu.memory_space<any>> -> memref<1x96xf32, #tpu.memory_space<any>>
    %c6_i32 = arith.constant 6 : i32
    %c0_i32_33 = arith.constant 0 : i32
    %46 = tpu.memref_slice %arg8[%c6_i32, %c0_i32_33] : memref<8x96xf32, #tpu.memory_space<vmem>> -> memref<1x96xf32, #tpu.memory_space<vmem>>
    %47 = tpu.memref_slice %arg9[%c0_i32_31] : memref<1x!tpu.dma_semaphore, #tpu.memory_space<semaphore_mem>> -> memref<1x!tpu.dma_semaphore, #tpu.memory_space<semaphore_mem>>
    %48 = tpu.memref_squeeze %47 : memref<1x!tpu.dma_semaphore, #tpu.memory_space<semaphore_mem>> -> memref<!tpu.dma_semaphore, #tpu.memory_space<semaphore_mem>>
    tpu.enqueue_dma source(%45 : memref<1x96xf32, #tpu.memory_space<any>>) target(%46 : memref<1x96xf32, #tpu.memory_space<vmem>>) target_semaphore(%48 : memref<!tpu.dma_semaphore, #tpu.memory_space<semaphore_mem>>)
    %c7 = arith.constant 7 : index
    %49 = memref.load %arg0[%c7] : memref<8xi32, #tpu.memory_space<smem>>
    %c0_i32_34 = arith.constant 0 : i32
    %c511_i32_35 = arith.constant 511 : i32
    %50 = arith.maxsi %c0_i32_34, %49 : i32
    %51 = arith.minsi %c511_i32_35, %50 : i32
    %c0_i32_36 = arith.constant 0 : i32
    %c0_i32_37 = arith.constant 0 : i32
    %52 = tpu.memref_slice %arg2[%51, %c0_i32_37] : memref<512x96xf32, #tpu.memory_space<any>> -> memref<1x96xf32, #tpu.memory_space<any>>
    %c7_i32 = arith.constant 7 : i32
    %c0_i32_38 = arith.constant 0 : i32
    %53 = tpu.memref_slice %arg8[%c7_i32, %c0_i32_38] : memref<8x96xf32, #tpu.memory_space<vmem>> -> memref<1x96xf32, #tpu.memory_space<vmem>>
    %54 = tpu.memref_slice %arg9[%c0_i32_36] : memref<1x!tpu.dma_semaphore, #tpu.memory_space<semaphore_mem>> -> memref<1x!tpu.dma_semaphore, #tpu.memory_space<semaphore_mem>>
    %55 = tpu.memref_squeeze %54 : memref<1x!tpu.dma_semaphore, #tpu.memory_space<semaphore_mem>> -> memref<!tpu.dma_semaphore, #tpu.memory_space<semaphore_mem>>
    tpu.enqueue_dma source(%52 : memref<1x96xf32, #tpu.memory_space<any>>) target(%53 : memref<1x96xf32, #tpu.memory_space<vmem>>) target_semaphore(%55 : memref<!tpu.dma_semaphore, #tpu.memory_space<semaphore_mem>>)
    %c0_39 = arith.constant 0 : index
    %c0_40 = arith.constant 0 : index
    %56 = vector.load %arg1[%c0_39, %c0_40] : memref<8x32xf32, #tpu.memory_space<vmem>>, vector<8x32xf32>
    %c0_41 = arith.constant 0 : index
    %c0_42 = arith.constant 0 : index
    %57 = vector.load %arg3[%c0_41, %c0_42] : memref<32x96xf32, #tpu.memory_space<vmem>>, vector<32x96xf32>
    %cst = arith.constant dense<0.000000e+00> : vector<8x96xf32>
    %58 = tpu.matmul %56, %57, %cst {dimension_numbers = #tpu.dot_dimension_numbers<[1], [0], [0], [1], [0, 0, 1, 1], [], []>} : vector<8x32xf32>, vector<32x96xf32>, vector<8x96xf32> -> vector<8x96xf32>
    %c0_i32_43 = arith.constant 0 : i32
    %c0_i32_44 = arith.constant 0 : i32
    %59 = tpu.memref_slice %arg2[%2, %c0_i32_44] : memref<512x96xf32, #tpu.memory_space<any>> -> memref<1x96xf32, #tpu.memory_space<any>>
    %c0_i32_45 = arith.constant 0 : i32
    %c0_i32_46 = arith.constant 0 : i32
    %60 = tpu.memref_slice %arg8[%c0_i32_45, %c0_i32_46] : memref<8x96xf32, #tpu.memory_space<vmem>> -> memref<1x96xf32, #tpu.memory_space<vmem>>
    %61 = tpu.memref_slice %arg9[%c0_i32_43] : memref<1x!tpu.dma_semaphore, #tpu.memory_space<semaphore_mem>> -> memref<1x!tpu.dma_semaphore, #tpu.memory_space<semaphore_mem>>
    %62 = tpu.memref_squeeze %61 : memref<1x!tpu.dma_semaphore, #tpu.memory_space<semaphore_mem>> -> memref<!tpu.dma_semaphore, #tpu.memory_space<semaphore_mem>>
    tpu.wait_dma2 semaphore(%62 : memref<!tpu.dma_semaphore, #tpu.memory_space<semaphore_mem>>) src(%59 : memref<1x96xf32, #tpu.memory_space<any>>) dst(%60 : memref<1x96xf32, #tpu.memory_space<vmem>>)
    %c0_i32_47 = arith.constant 0 : i32
    %c0_i32_48 = arith.constant 0 : i32
    %63 = tpu.memref_slice %arg2[%9, %c0_i32_48] : memref<512x96xf32, #tpu.memory_space<any>> -> memref<1x96xf32, #tpu.memory_space<any>>
    %c1_i32_49 = arith.constant 1 : i32
    %c0_i32_50 = arith.constant 0 : i32
    %64 = tpu.memref_slice %arg8[%c1_i32_49, %c0_i32_50] : memref<8x96xf32, #tpu.memory_space<vmem>> -> memref<1x96xf32, #tpu.memory_space<vmem>>
    %65 = tpu.memref_slice %arg9[%c0_i32_47] : memref<1x!tpu.dma_semaphore, #tpu.memory_space<semaphore_mem>> -> memref<1x!tpu.dma_semaphore, #tpu.memory_space<semaphore_mem>>
    %66 = tpu.memref_squeeze %65 : memref<1x!tpu.dma_semaphore, #tpu.memory_space<semaphore_mem>> -> memref<!tpu.dma_semaphore, #tpu.memory_space<semaphore_mem>>
    tpu.wait_dma2 semaphore(%66 : memref<!tpu.dma_semaphore, #tpu.memory_space<semaphore_mem>>) src(%63 : memref<1x96xf32, #tpu.memory_space<any>>) dst(%64 : memref<1x96xf32, #tpu.memory_space<vmem>>)
    %c0_i32_51 = arith.constant 0 : i32
    %c0_i32_52 = arith.constant 0 : i32
    %67 = tpu.memref_slice %arg2[%16, %c0_i32_52] : memref<512x96xf32, #tpu.memory_space<any>> -> memref<1x96xf32, #tpu.memory_space<any>>
    %c2_i32_53 = arith.constant 2 : i32
    %c0_i32_54 = arith.constant 0 : i32
    %68 = tpu.memref_slice %arg8[%c2_i32_53, %c0_i32_54] : memref<8x96xf32, #tpu.memory_space<vmem>> -> memref<1x96xf32, #tpu.memory_space<vmem>>
    %69 = tpu.memref_slice %arg9[%c0_i32_51] : memref<1x!tpu.dma_semaphore, #tpu.memory_space<semaphore_mem>> -> memref<1x!tpu.dma_semaphore, #tpu.memory_space<semaphore_mem>>
    %70 = tpu.memref_squeeze %69 : memref<1x!tpu.dma_semaphore, #tpu.memory_space<semaphore_mem>> -> memref<!tpu.dma_semaphore, #tpu.memory_space<semaphore_mem>>
    tpu.wait_dma2 semaphore(%70 : memref<!tpu.dma_semaphore, #tpu.memory_space<semaphore_mem>>) src(%67 : memref<1x96xf32, #tpu.memory_space<any>>) dst(%68 : memref<1x96xf32, #tpu.memory_space<vmem>>)
    %c0_i32_55 = arith.constant 0 : i32
    %c0_i32_56 = arith.constant 0 : i32
    %71 = tpu.memref_slice %arg2[%23, %c0_i32_56] : memref<512x96xf32, #tpu.memory_space<any>> -> memref<1x96xf32, #tpu.memory_space<any>>
    %c3_i32_57 = arith.constant 3 : i32
    %c0_i32_58 = arith.constant 0 : i32
    %72 = tpu.memref_slice %arg8[%c3_i32_57, %c0_i32_58] : memref<8x96xf32, #tpu.memory_space<vmem>> -> memref<1x96xf32, #tpu.memory_space<vmem>>
    %73 = tpu.memref_slice %arg9[%c0_i32_55] : memref<1x!tpu.dma_semaphore, #tpu.memory_space<semaphore_mem>> -> memref<1x!tpu.dma_semaphore, #tpu.memory_space<semaphore_mem>>
    %74 = tpu.memref_squeeze %73 : memref<1x!tpu.dma_semaphore, #tpu.memory_space<semaphore_mem>> -> memref<!tpu.dma_semaphore, #tpu.memory_space<semaphore_mem>>
    tpu.wait_dma2 semaphore(%74 : memref<!tpu.dma_semaphore, #tpu.memory_space<semaphore_mem>>) src(%71 : memref<1x96xf32, #tpu.memory_space<any>>) dst(%72 : memref<1x96xf32, #tpu.memory_space<vmem>>)
    %c0_i32_59 = arith.constant 0 : i32
    %c0_i32_60 = arith.constant 0 : i32
    %75 = tpu.memref_slice %arg2[%30, %c0_i32_60] : memref<512x96xf32, #tpu.memory_space<any>> -> memref<1x96xf32, #tpu.memory_space<any>>
    %c4_i32_61 = arith.constant 4 : i32
    %c0_i32_62 = arith.constant 0 : i32
    %76 = tpu.memref_slice %arg8[%c4_i32_61, %c0_i32_62] : memref<8x96xf32, #tpu.memory_space<vmem>> -> memref<1x96xf32, #tpu.memory_space<vmem>>
    %77 = tpu.memref_slice %arg9[%c0_i32_59] : memref<1x!tpu.dma_semaphore, #tpu.memory_space<semaphore_mem>> -> memref<1x!tpu.dma_semaphore, #tpu.memory_space<semaphore_mem>>
    %78 = tpu.memref_squeeze %77 : memref<1x!tpu.dma_semaphore, #tpu.memory_space<semaphore_mem>> -> memref<!tpu.dma_semaphore, #tpu.memory_space<semaphore_mem>>
    tpu.wait_dma2 semaphore(%78 : memref<!tpu.dma_semaphore, #tpu.memory_space<semaphore_mem>>) src(%75 : memref<1x96xf32, #tpu.memory_space<any>>) dst(%76 : memref<1x96xf32, #tpu.memory_space<vmem>>)
    %c0_i32_63 = arith.constant 0 : i32
    %c0_i32_64 = arith.constant 0 : i32
    %79 = tpu.memref_slice %arg2[%37, %c0_i32_64] : memref<512x96xf32, #tpu.memory_space<any>> -> memref<1x96xf32, #tpu.memory_space<any>>
    %c5_i32_65 = arith.constant 5 : i32
    %c0_i32_66 = arith.constant 0 : i32
    %80 = tpu.memref_slice %arg8[%c5_i32_65, %c0_i32_66] : memref<8x96xf32, #tpu.memory_space<vmem>> -> memref<1x96xf32, #tpu.memory_space<vmem>>
    %81 = tpu.memref_slice %arg9[%c0_i32_63] : memref<1x!tpu.dma_semaphore, #tpu.memory_space<semaphore_mem>> -> memref<1x!tpu.dma_semaphore, #tpu.memory_space<semaphore_mem>>
    %82 = tpu.memref_squeeze %81 : memref<1x!tpu.dma_semaphore, #tpu.memory_space<semaphore_mem>> -> memref<!tpu.dma_semaphore, #tpu.memory_space<semaphore_mem>>
    tpu.wait_dma2 semaphore(%82 : memref<!tpu.dma_semaphore, #tpu.memory_space<semaphore_mem>>) src(%79 : memref<1x96xf32, #tpu.memory_space<any>>) dst(%80 : memref<1x96xf32, #tpu.memory_space<vmem>>)
    %c0_i32_67 = arith.constant 0 : i32
    %c0_i32_68 = arith.constant 0 : i32
    %83 = tpu.memref_slice %arg2[%44, %c0_i32_68] : memref<512x96xf32, #tpu.memory_space<any>> -> memref<1x96xf32, #tpu.memory_space<any>>
    %c6_i32_69 = arith.constant 6 : i32
    %c0_i32_70 = arith.constant 0 : i32
    %84 = tpu.memref_slice %arg8[%c6_i32_69, %c0_i32_70] : memref<8x96xf32, #tpu.memory_space<vmem>> -> memref<1x96xf32, #tpu.memory_space<vmem>>
    %85 = tpu.memref_slice %arg9[%c0_i32_67] : memref<1x!tpu.dma_semaphore, #tpu.memory_space<semaphore_mem>> -> memref<1x!tpu.dma_semaphore, #tpu.memory_space<semaphore_mem>>
    %86 = tpu.memref_squeeze %85 : memref<1x!tpu.dma_semaphore, #tpu.memory_space<semaphore_mem>> -> memref<!tpu.dma_semaphore, #tpu.memory_space<semaphore_mem>>
    tpu.wait_dma2 semaphore(%86 : memref<!tpu.dma_semaphore, #tpu.memory_space<semaphore_mem>>) src(%83 : memref<1x96xf32, #tpu.memory_space<any>>) dst(%84 : memref<1x96xf32, #tpu.memory_space<vmem>>)
    %c0_i32_71 = arith.constant 0 : i32
    %c0_i32_72 = arith.constant 0 : i32
    %87 = tpu.memref_slice %arg2[%51, %c0_i32_72] : memref<512x96xf32, #tpu.memory_space<any>> -> memref<1x96xf32, #tpu.memory_space<any>>
    %c7_i32_73 = arith.constant 7 : i32
    %c0_i32_74 = arith.constant 0 : i32
    %88 = tpu.memref_slice %arg8[%c7_i32_73, %c0_i32_74] : memref<8x96xf32, #tpu.memory_space<vmem>> -> memref<1x96xf32, #tpu.memory_space<vmem>>
    %89 = tpu.memref_slice %arg9[%c0_i32_71] : memref<1x!tpu.dma_semaphore, #tpu.memory_space<semaphore_mem>> -> memref<1x!tpu.dma_semaphore, #tpu.memory_space<semaphore_mem>>
    %90 = tpu.memref_squeeze %89 : memref<1x!tpu.dma_semaphore, #tpu.memory_space<semaphore_mem>> -> memref<!tpu.dma_semaphore, #tpu.memory_space<semaphore_mem>>
    tpu.wait_dma2 semaphore(%90 : memref<!tpu.dma_semaphore, #tpu.memory_space<semaphore_mem>>) src(%87 : memref<1x96xf32, #tpu.memory_space<any>>) dst(%88 : memref<1x96xf32, #tpu.memory_space<vmem>>)
    %c0_75 = arith.constant 0 : index
    %c0_76 = arith.constant 0 : index
    %91 = vector.load %arg8[%c0_75, %c0_76] : memref<8x96xf32, #tpu.memory_space<vmem>>, vector<8x96xf32>
    %c0_77 = arith.constant 0 : index
    %c0_78 = arith.constant 0 : index
    %92 = vector.load %arg4[%c0_77, %c0_78] : memref<1x96xf32, #tpu.memory_space<vmem>>, vector<1x96xf32>
    %93 = vector.broadcast %92 : vector<1x96xf32> to vector<8x96xf32>
    %94 = arith.addf %91, %93 : vector<8x96xf32>
    %95 = vector.extract_strided_slice %94 {offsets = [0, 0], sizes = [8, 32], strides = [1, 1]} : vector<8x96xf32> to vector<8x32xf32>
    %96 = vector.extract_strided_slice %58 {offsets = [0, 0], sizes = [8, 32], strides = [1, 1]} : vector<8x96xf32> to vector<8x32xf32>
    %97 = arith.addf %95, %96 : vector<8x32xf32>
    %98 = arith.negf %97 : vector<8x32xf32>
    %99 = math.exp %98 : vector<8x32xf32>
    %cst_79 = arith.constant 1.000000e+00 : f32
    %100 = vector.broadcast %cst_79 : f32 to vector<8x32xf32>
    %101 = arith.addf %100, %99 : vector<8x32xf32>
    %102 = arith.divf %100, %101 : vector<8x32xf32>
    %103 = vector.extract_strided_slice %94 {offsets = [0, 32], sizes = [8, 32], strides = [1, 1]} : vector<8x96xf32> to vector<8x32xf32>
    %104 = vector.extract_strided_slice %58 {offsets = [0, 32], sizes = [8, 32], strides = [1, 1]} : vector<8x96xf32> to vector<8x32xf32>
    %105 = arith.addf %103, %104 : vector<8x32xf32>
    %106 = arith.negf %105 : vector<8x32xf32>
    %107 = math.exp %106 : vector<8x32xf32>
    %cst_80 = arith.constant 1.000000e+00 : f32
    %108 = vector.broadcast %cst_80 : f32 to vector<8x32xf32>
    %109 = arith.addf %108, %107 : vector<8x32xf32>
    %110 = arith.divf %108, %109 : vector<8x32xf32>
    %111 = vector.extract_strided_slice %94 {offsets = [0, 64], sizes = [8, 32], strides = [1, 1]} : vector<8x96xf32> to vector<8x32xf32>
    %112 = vector.extract_strided_slice %58 {offsets = [0, 64], sizes = [8, 32], strides = [1, 1]} : vector<8x96xf32> to vector<8x32xf32>
    %c0_81 = arith.constant 0 : index
    %c0_82 = arith.constant 0 : index
    %113 = vector.load %arg5[%c0_81, %c0_82] : memref<1x32xf32, #tpu.memory_space<vmem>>, vector<1x32xf32>
    %114 = vector.broadcast %113 : vector<1x32xf32> to vector<8x32xf32>
    %115 = arith.addf %112, %114 : vector<8x32xf32>
    %116 = arith.mulf %102, %115 : vector<8x32xf32>
    %117 = arith.addf %111, %116 : vector<8x32xf32>
    %118 = math.tanh %117 : vector<8x32xf32>
    %cst_83 = arith.constant 1.000000e+00 : f32
    %119 = vector.broadcast %cst_83 : f32 to vector<8x32xf32>
    %120 = arith.subf %119, %110 : vector<8x32xf32>
    %121 = arith.mulf %120, %118 : vector<8x32xf32>
    %122 = arith.mulf %110, %56 : vector<8x32xf32>
    %123 = arith.addf %121, %122 : vector<8x32xf32>
    %c0_84 = arith.constant 0 : index
    %c0_85 = arith.constant 0 : index
    %124 = vector.load %arg6[%c0_84, %c0_85] : memref<8x32xf32, #tpu.memory_space<vmem>>, vector<8x32xf32>
    tpu.vector_store %arg6[%c0_84, %c0_85], %123 {strides = array<i32>} : memref<8x32xf32, #tpu.memory_space<vmem>>, vector<8x32xf32>,
    %125 = arith.truncf %123 : vector<8x32xf32> to vector<8x32xbf16>
    %c0_86 = arith.constant 0 : index
    %c0_87 = arith.constant 0 : index
    %126 = vector.load %arg7[%c0_86, %c0_87] : memref<8x32xbf16, #tpu.memory_space<vmem>>, vector<8x32xbf16>
    tpu.vector_store %arg7[%c0_86, %c0_87], %125 {strides = array<i32>} : memref<8x32xbf16, #tpu.memory_space<vmem>>, vector<8x32xbf16>,
    return
  }
}

</mosaic_0001>

<llo_original>
// kernel: gru4rec_forward.2
$region0: #{gru4rec_forward.2}
  #allocation0 [shape = 'u32[]', space=smem, size = 0x4, offset = 0x4, fixed_abs, tag = 'smem constant byte address 0x4 - core index']
  #allocation1 [shape = 'u32[144,128]{1,0:T(1,128)}', space=vmem, size = 0x12000, scoped, tag = 'internal scratch']
  #allocation2 [shape = 'f32[8,96]{1,0:T(8,128)}', space=vmem, size = 0x1000, scoped, tag = 'scratch operand']
  #allocation3 [shape = 's32[1]{0}', space=sflag, size = 0x4, scoped, tag = 'scratch operand']
  #allocation6 [shape = 's32[]', space=sflag, size = 0x4, offset = 0, fixed_abs, tag = 'sflag constant byte address 0x0 - dummy sync flag']
  #allocation7 [shape = 's32[]', space=sflag, size = 0x4, offset = 0, fixed_abs, tag = 'sflag constant byte address 0x0 - dummy sync flag']
  #allocation8 [shape = 's32[]', space=sflag, size = 0x4, offset = 0, fixed_abs, tag = 'sflag constant byte address 0x0 - dummy sync flag']
  #allocation9 [shape = 's32[]', space=sflag, size = 0x4, offset = 0, fixed_abs, tag = 'sflag constant byte address 0x0 - dummy sync flag']
  #allocation10 [shape = 's32[]', space=sflag, size = 0x4, offset = 0, fixed_abs, tag = 'sflag constant byte address 0x0 - dummy sync flag']
  #allocation11 [shape = 's32[]', space=sflag, size = 0x4, offset = 0, fixed_abs, tag = 'sflag constant byte address 0x0 - dummy sync flag']
  #allocation12 [shape = 's32[]', space=sflag, size = 0x4, offset = 0, fixed_abs, tag = 'sflag constant byte address 0x0 - dummy sync flag']
  #allocation13 [shape = 's32[]', space=sflag, size = 0x4, offset = 0, fixed_abs, tag = 'sflag constant byte address 0x0 - dummy sync flag']
  %s0 = inlined_call_operand.vmem [shape: s32[8], index: 0, kind: input, shape index: {}]
  %s1 = inlined_call_operand.vmem [shape: f32[8,32], index: 1, kind: input, shape index: {}, may-alias: {1,6}]
  %s2 = inlined_call_operand.vmem [shape: f32[512,96], index: 2, kind: input, shape index: {}]
  %s3 = inlined_call_operand.vmem [shape: f32[32,96], index: 3, kind: input, shape index: {}]
  %s4 = inlined_call_operand.vmem [shape: f32[1,96], index: 4, kind: input, shape index: {}]
  %s5 = inlined_call_operand.vmem [shape: f32[1,32], index: 5, kind: input, shape index: {}]
  %s6 = inlined_call_operand.vmem [shape: f32[8,32], index: 6, kind: output, shape index: {0}, may-alias: {1,6}]
  %s7 = inlined_call_operand.vmem [shape: bf16[8,32], index: 7, kind: output, shape index: {1}]
  %8 = xla_tuple %s6, %s7
  %s9 = sld [smem:[#allocation0]]
  $region282: #{gru4rec_forward.2} parent=0
    _
  %s11 = ssub.s32 1, %s9
  %s12 = scalar_select 0, %s11, %s9
  $region1: #{gru4rec_forward.2} parent=0
    #allocation4 [shape = 'u8[512]{0}', space=smem, size = 0x200, scoped, tag = 'input window, operand 0, single buffered']
    #allocation5 [shape = 's32[1]{0}', space=sflag, size = 0x4, scoped, tag = 'scoped memory for gru4rec_forward.2']
    %13 = vsyncpa [#allocation5], 0
    // Predicated region
    $region2: #{gru4rec_forward.2} parent=1 // pred_check
      _
    $region3: #{gru4rec_forward.2} parent=1 // pred_check_branch
      %15 = sbr.rel (0) target = $region5
    $region4: #{gru4rec_forward.2} parent=1 // pred_region
      %s17 = ssub.s32 16, 16
      %18 = vsyncadd [#allocation5], %s17
      %s20 = sshll.u32 %s0, 4
      %s21 = int_to_ptr.vmem [resolvable:$true] %s20
      %23 = dma.vmem_to_smem %s21, 16, [#allocation4], [#allocation5]
    $region5: #{gru4rec_forward.2} parent=1 // pred_fallthru
      _
    // Predicated region
    $region6: #{gru4rec_forward.2} parent=1 // pred_check
      _
    $region7: #{gru4rec_forward.2} parent=1 // pred_check_branch
      %25 = sbr.rel (0) target = $region9
    $region8: #{gru4rec_forward.2} parent=1 // pred_region
      _
    $region9: #{gru4rec_forward.2} parent=1 // pred_fallthru
      _
    // Predicated region
    $region10: #{gru4rec_forward.2} parent=1 // pred_check
      _
    $region11: #{gru4rec_forward.2} parent=1 // pred_check_branch
      %27 = sbr.rel (0) target = $region13
    $region12: #{gru4rec_forward.2} parent=1 // pred_region
      _
    $region13: #{gru4rec_forward.2} parent=1 // pred_fallthru
      _
    // Predicated region
    $region14: #{gru4rec_forward.2} parent=1 // pred_check
      _
    $region15: #{gru4rec_forward.2} parent=1 // pred_check_branch
      %29 = sbr.rel (0) target = $region17
    $region16: #{gru4rec_forward.2} parent=1 // pred_region
      _
    $region17: #{gru4rec_forward.2} parent=1 // pred_fallthru
      _
    // Predicated region
    $region18: #{gru4rec_forward.2} parent=1 // pred_check
      _
    $region19: #{gru4rec_forward.2} parent=1 // pred_check_branch
      %31 = sbr.rel (0) target = $region21
    $region20: #{gru4rec_forward.2} parent=1 // pred_region
      _
    $region21: #{gru4rec_forward.2} parent=1 // pred_fallthru
      _
    // Predicated region
    $region22: #{gru4rec_forward.2} parent=1 // pred_check
      _
    $region23: #{gru4rec_forward.2} parent=1 // pred_check_branch
      %33 = sbr.rel (0) target = $region25
    $region24: #{gru4rec_forward.2} parent=1 // pred_region
      %34 = dma.done [#allocation5], 16
    $region25: #{gru4rec_forward.2} parent=1 // pred_fallthru
      _
    %35 = sfence
    %s36 = sld [smem:[#allocation4]]
    %p37 = scmp.gt.s32.totalorder %s36, 0
    %s38 = scalar_select %p37, %s36, 0
    %p39 = scmp.lt.s32.totalorder %s38, 511
    %s40 = scalar_select %p39, %s38, 511
    %s41 = scalar_lea.vmem %s2, %s40
    %p43 = scmp.lt.u32.totalorder 1, 8
    %p44 = pneg %p43
    // Predicated region
    $region26: #{gru4rec_forward.2} parent=1 // pred_check
      _
    $region27: #{gru4rec_forward.2} parent=1 // pred_check_branch
      %46 = sbr.rel (%p43) target = $region29
    $region28: #{gru4rec_forward.2} parent=1 // pred_region
      %s61 = sand.u32 1, 7
      %p62 = scmp.eq.s32.totalorder %s61, 0
      %p63 = pneg %p62
      // Predicated region
      $region41: #{gru4rec_forward.2} parent=28 // pred_check
        _
      $region42: #{gru4rec_forward.2} parent=28 // pred_check_branch
        %65 = sbr.rel (%p62) target = $region44
      $region43: #{gru4rec_forward.2} parent=28 // pred_region
        %s66 = sand.u32 1, 7
        %s67 = ssub.s32 1, %s66
        %s68 = scalar_lea.vmem %s41, %s67
        %s69 = ssub.s32 1, %s66
        %s70 = scalar_lea.vmem [#allocation2], %s69
        %s71 = sshllo.u32 0, %s66
        loop: start=0, step=1, limit=1
        $region45: #{gru4rec_forward.2} parent=43 // loop_pre_header
          _
        $region46: #{gru4rec_forward.2} parent=43 // loop_header
          %s73 = sphi 0, %s77
          %p74 = scmp.ge.s32.totalorder %s73, 1
          %s78 = sphi %s68, %s68
          %s79 = sphi %s70, %s70
        $region47: #{gru4rec_forward.2} parent=43 // loop_header_branch
          %76 = sbr.rel (%p74) target = $region51
        $region48: #{gru4rec_forward.2} parent=43 // loop_body
          %v80 = vld [vmem:[%s78] sm:%s71]
          %81 = vst [vmem:[%s79] sm:%s71] %v80
        $region49: #{gru4rec_forward.2} parent=43 // loop_footer
          %s77 = sadd.s32 1, %s73
        $region50: #{gru4rec_forward.2} parent=43 // loop_footer_branch
          %72 = sbr.rel target = $region46
        $region51: #{gru4rec_forward.2} parent=43 // loop_exit
          _
      $region44: #{gru4rec_forward.2} parent=28 // pred_fallthru
        _
    $region29: #{gru4rec_forward.2} parent=1 // pred_fallthru
      _
    // Predicated region
    $region30: #{gru4rec_forward.2} parent=1 // pred_check
      %p47 = pneg %p43
    $region31: #{gru4rec_forward.2} parent=1 // pred_check_branch
      %49 = sbr.rel (%p47) target = $region33
    $region32: #{gru4rec_forward.2} parent=1 // pred_region
      %s50 = sshllo.u32 0, 1
      loop: start=0, step=1, limit=1
      $region34: #{gru4rec_forward.2} parent=32 // loop_pre_header
        _
      $region35: #{gru4rec_forward.2} parent=32 // loop_header
        %s52 = sphi 0, %s56
        %p53 = scmp.ge.s32.totalorder %s52, 1
        %s57 = sphi %s41, %s41
        %s58 = sphi [#allocation2], [#allocation2]
      $region36: #{gru4rec_forward.2} parent=32 // loop_header_branch
        %55 = sbr.rel (%p53) target = $region40
      $region37: #{gru4rec_forward.2} parent=32 // loop_body
        %v59 = vld [vmem:[%s57] sm:%s50]
        %60 = vst [vmem:[%s58] sm:%s50] %v59
      $region38: #{gru4rec_forward.2} parent=32 // loop_footer
        %s56 = sadd.s32 1, %s52
      $region39: #{gru4rec_forward.2} parent=32 // loop_footer_branch
        %51 = sbr.rel target = $region35
      $region40: #{gru4rec_forward.2} parent=32 // loop_exit
        _
    $region33: #{gru4rec_forward.2} parent=1 // pred_fallthru
      _
    // Predicated region
    $region52: #{gru4rec_forward.2} parent=1 // pred_check
      _
    $region53: #{gru4rec_forward.2} parent=1 // pred_check_branch
      %84 = sbr.rel (0) target = $region55
    $region54: #{gru4rec_forward.2} parent=1 // pred_region
      %85 = vsyncadd [#allocation3], 16
    $region55: #{gru4rec_forward.2} parent=1 // pred_fallthru
      _
    %s86 = sld [smem:[#allocation4 + $0x1]]
    %p87 = scmp.gt.s32.totalorder %s86, 0
    %s88 = scalar_select %p87, %s86, 0
    %p89 = scmp.lt.s32.totalorder %s88, 511
    %s90 = scalar_select %p89, %s88, 511
    %s91 = scalar_lea.vmem %s2, %s90
    %s92 = scalar_lea.vmem [#allocation2], 1
    %p94 = scmp.lt.u32.totalorder 1, 8
    %p95 = pneg %p94
    // Predicated region
    $region56: #{gru4rec_forward.2} parent=1 // pred_check
      _
    $region57: #{gru4rec_forward.2} parent=1 // pred_check_branch
      %97 = sbr.rel (%p94) target = $region59
    $region58: #{gru4rec_forward.2} parent=1 // pred_region
      %s112 = sand.u32 1, 7
      %p113 = scmp.eq.s32.totalorder %s112, 0
      %p114 = pneg %p113
      // Predicated region
      $region71: #{gru4rec_forward.2} parent=58 // pred_check
        _
      $region72: #{gru4rec_forward.2} parent=58 // pred_check_branch
        %116 = sbr.rel (%p113) target = $region74
      $region73: #{gru4rec_forward.2} parent=58 // pred_region
        %s117 = sand.u32 1, 7
        %s118 = ssub.s32 1, %s117
        %s119 = scalar_lea.vmem %s91, %s118
        %s120 = ssub.s32 1, %s117
        %s121 = scalar_lea.vmem %s92, %s120 [#allocation2]
        %s122 = sshllo.u32 0, %s117
        loop: start=0, step=1, limit=1
        $region75: #{gru4rec_forward.2} parent=73 // loop_pre_header
          _
        $region76: #{gru4rec_forward.2} parent=73 // loop_header
          %s124 = sphi 0, %s128
          %p125 = scmp.ge.s32.totalorder %s124, 1
          %s129 = sphi %s119, %s119
          %s130 = sphi %s121, %s121
        $region77: #{gru4rec_forward.2} parent=73 // loop_header_branch
          %127 = sbr.rel (%p125) target = $region81
        $region78: #{gru4rec_forward.2} parent=73 // loop_body
          %v131 = vld [vmem:[%s129] sm:%s122]
          %132 = vst [vmem:[%s130] sm:%s122] %v131
        $region79: #{gru4rec_forward.2} parent=73 // loop_footer
          %s128 = sadd.s32 1, %s124
        $region80: #{gru4rec_forward.2} parent=73 // loop_footer_branch
          %123 = sbr.rel target = $region76
        $region81: #{gru4rec_forward.2} parent=73 // loop_exit
          _
      $region74: #{gru4rec_forward.2} parent=58 // pred_fallthru
        _
    $region59: #{gru4rec_forward.2} parent=1 // pred_fallthru
      _
    // Predicated region
    $region60: #{gru4rec_forward.2} parent=1 // pred_check
      %p98 = pneg %p94
    $region61: #{gru4rec_forward.2} parent=1 // pred_check_branch
      %100 = sbr.rel (%p98) target = $region63
    $region62: #{gru4rec_forward.2} parent=1 // pred_region
      %s101 = sshllo.u32 0, 1
      loop: start=0, step=1, limit=1
      $region64: #{gru4rec_forward.2} parent=62 // loop_pre_header
        _
      $region65: #{gru4rec_forward.2} parent=62 // loop_header
        %s103 = sphi 0, %s107
        %p104 = scmp.ge.s32.totalorder %s103, 1
        %s108 = sphi %s91, %s91
        %s109 = sphi %s92, %s92
      $region66: #{gru4rec_forward.2} parent=62 // loop_header_branch
        %106 = sbr.rel (%p104) target = $region70
      $region67: #{gru4rec_forward.2} parent=62 // loop_body
        %v110 = vld [vmem:[%s108] sm:%s101]
        %111 = vst [vmem:[%s109] sm:%s101] %v110
      $region68: #{gru4rec_forward.2} parent=62 // loop_footer
        %s107 = sadd.s32 1, %s103
      $region69: #{gru4rec_forward.2} parent=62 // loop_footer_branch
        %102 = sbr.rel target = $region65
      $region70: #{gru4rec_forward.2} parent=62 // loop_exit
        _
    $region63: #{gru4rec_forward.2} parent=1 // pred_fallthru
      _
    // Predicated region
    $region82: #{gru4rec_forward.2} parent=1 // pred_check
      _
    $region83: #{gru4rec_forward.2} parent=1 // pred_check_branch
      %135 = sbr.rel (0) target = $region85
    $region84: #{gru4rec_forward.2} parent=1 // pred_region
      %136 = vsyncadd [#allocation3], 16
    $region85: #{gru4rec_forward.2} parent=1 // pred_fallthru
      _
    %s137 = sld [smem:[#allocation4 + $0x2]]
    %p138 = scmp.gt.s32.totalorder %s137, 0
    %s139 = scalar_select %p138, %s137, 0
    %p140 = scmp.lt.s32.totalorder %s139, 511
    %s141 = scalar_select %p140, %s139, 511
    %s142 = scalar_lea.vmem %s2, %s141
    %s143 = scalar_lea.vmem [#allocation2], 2
    %p145 = scmp.lt.u32.totalorder 1, 8
    %p146 = pneg %p145
    // Predicated region
    $region86: #{gru4rec_forward.2} parent=1 // pred_check
      _
    $region87: #{gru4rec_forward.2} parent=1 // pred_check_branch
      %148 = sbr.rel (%p145) target = $region89
    $region88: #{gru4rec_forward.2} parent=1 // pred_region
      %s163 = sand.u32 1, 7
      %p164 = scmp.eq.s32.totalorder %s163, 0
      %p165 = pneg %p164
      // Predicated region
      $region101: #{gru4rec_forward.2} parent=88 // pred_check
        _
      $region102: #{gru4rec_forward.2} parent=88 // pred_check_branch
        %167 = sbr.rel (%p164) target = $region104
      $region103: #{gru4rec_forward.2} parent=88 // pred_region
        %s168 = sand.u32 1, 7
        %s169 = ssub.s32 1, %s168
        %s170 = scalar_lea.vmem %s142, %s169
        %s171 = ssub.s32 1, %s168
        %s172 = scalar_lea.vmem %s143, %s171 [#allocation2]
        %s173 = sshllo.u32 0, %s168
        loop: start=0, step=1, limit=1
        $region105: #{gru4rec_forward.2} parent=103 // loop_pre_header
          _
        $region106: #{gru4rec_forward.2} parent=103 // loop_header
          %s175 = sphi 0, %s179
          %p176 = scmp.ge.s32.totalorder %s175, 1
          %s180 = sphi %s170, %s170
          %s181 = sphi %s172, %s172
        $region107: #{gru4rec_forward.2} parent=103 // loop_header_branch
          %178 = sbr.rel (%p176) target = $region111
        $region108: #{gru4rec_forward.2} parent=103 // loop_body
          %v182 = vld [vmem:[%s180] sm:%s173]
          %183 = vst [vmem:[%s181] sm:%s173] %v182
        $region109: #{gru4rec_forward.2} parent=103 // loop_footer
          %s179 = sadd.s32 1, %s175
        $region110: #{gru4rec_forward.2} parent=103 // loop_footer_branch
          %174 = sbr.rel target = $region106
        $region111: #{gru4rec_forward.2} parent=103 // loop_exit
          _
      $region104: #{gru4rec_forward.2} parent=88 // pred_fallthru
        _
    $region89: #{gru4rec_forward.2} parent=1 // pred_fallthru
      _
    // Predicated region
    $region90: #{gru4rec_forward.2} parent=1 // pred_check
      %p149 = pneg %p145
    $region91: #{gru4rec_forward.2} parent=1 // pred_check_branch
      %151 = sbr.rel (%p149) target = $region93
    $region92: #{gru4rec_forward.2} parent=1 // pred_region
      %s152 = sshllo.u32 0, 1
      loop: start=0, step=1, limit=1
      $region94: #{gru4rec_forward.2} parent=92 // loop_pre_header
        _
      $region95: #{gru4rec_forward.2} parent=92 // loop_header
        %s154 = sphi 0, %s158
        %p155 = scmp.ge.s32.totalorder %s154, 1
        %s159 = sphi %s142, %s142
        %s160 = sphi %s143, %s143
      $region96: #{gru4rec_forward.2} parent=92 // loop_header_branch
        %157 = sbr.rel (%p155) target = $region100
      $region97: #{gru4rec_forward.2} parent=92 // loop_body
        %v161 = vld [vmem:[%s159] sm:%s152]
        %162 = vst [vmem:[%s160] sm:%s152] %v161
      $region98: #{gru4rec_forward.2} parent=92 // loop_footer
        %s158 = sadd.s32 1, %s154
      $region99: #{gru4rec_forward.2} parent=92 // loop_footer_branch
        %153 = sbr.rel target = $region95
      $region100: #{gru4rec_forward.2} parent=92 // loop_exit
        _
    $region93: #{gru4rec_forward.2} parent=1 // pred_fallthru
      _
    // Predicated region
    $region112: #{gru4rec_forward.2} parent=1 // pred_check
      _
    $region113: #{gru4rec_forward.2} parent=1 // pred_check_branch
      %186 = sbr.rel (0) target = $region115
    $region114: #{gru4rec_forward.2} parent=1 // pred_region
      %187 = vsyncadd [#allocation3], 16
    $region115: #{gru4rec_forward.2} parent=1 // pred_fallthru
      _
    %s188 = sld [smem:[#allocation4 + $0x3]]
    %p189 = scmp.gt.s32.totalorder %s188, 0
    %s190 = scalar_select %p189, %s188, 0
    %p191 = scmp.lt.s32.totalorder %s190, 511
    %s192 = scalar_select %p191, %s190, 511
    %s193 = scalar_lea.vmem %s2, %s192
    %s194 = scalar_lea.vmem [#allocation2], 3
    %p196 = scmp.lt.u32.totalorder 1, 8
    %p197 = pneg %p196
    // Predicated region
    $region116: #{gru4rec_forward.2} parent=1 // pred_check
      _
    $region117: #{gru4rec_forward.2} parent=1 // pred_check_branch
      %199 = sbr.rel (%p196) target = $region119
    $region118: #{gru4rec_forward.2} parent=1 // pred_region
      %s214 = sand.u32 1, 7
      %p215 = scmp.eq.s32.totalorder %s214, 0
      %p216 = pneg %p215
      // Predicated region
      $region131: #{gru4rec_forward.2} parent=118 // pred_check
        _
      $region132: #{gru4rec_forward.2} parent=118 // pred_check_branch
        %218 = sbr.rel (%p215) target = $region134
      $region133: #{gru4rec_forward.2} parent=118 // pred_region
        %s219 = sand.u32 1, 7
        %s220 = ssub.s32 1, %s219
        %s221 = scalar_lea.vmem %s193, %s220
        %s222 = ssub.s32 1, %s219
        %s223 = scalar_lea.vmem %s194, %s222 [#allocation2]
        %s224 = sshllo.u32 0, %s219
        loop: start=0, step=1, limit=1
        $region135: #{gru4rec_forward.2} parent=133 // loop_pre_header
          _
        $region136: #{gru4rec_forward.2} parent=133 // loop_header
          %s226 = sphi 0, %s230
          %p227 = scmp.ge.s32.totalorder %s226, 1
          %s231 = sphi %s221, %s221
          %s232 = sphi %s223, %s223
        $region137: #{gru4rec_forward.2} parent=133 // loop_header_branch
          %229 = sbr.rel (%p227) target = $region141
        $region138: #{gru4rec_forward.2} parent=133 // loop_body
          %v233 = vld [vmem:[%s231] sm:%s224]
          %234 = vst [vmem:[%s232] sm:%s224] %v233
        $region139: #{gru4rec_forward.2} parent=133 // loop_footer
          %s230 = sadd.s32 1, %s226
        $region140: #{gru4rec_forward.2} parent=133 // loop_footer_branch
          %225 = sbr.rel target = $region136
        $region141: #{gru4rec_forward.2} parent=133 // loop_exit
          _
      $region134: #{gru4rec_forward.2} parent=118 // pred_fallthru
        _
    $region119: #{gru4rec_forward.2} parent=1 // pred_fallthru
      _
    // Predicated region
    $region120: #{gru4rec_forward.2} parent=1 // pred_check
      %p200 = pneg %p196
    $region121: #{gru4rec_forward.2} parent=1 // pred_check_branch
      %202 = sbr.rel (%p200) target = $region123
    $region122: #{gru4rec_forward.2} parent=1 // pred_region
      %s203 = sshllo.u32 0, 1
      loop: start=0, step=1, limit=1
      $region124: #{gru4rec_forward.2} parent=122 // loop_pre_header
        _
      $region125: #{gru4rec_forward.2} parent=122 // loop_header
        %s205 = sphi 0, %s209
        %p206 = scmp.ge.s32.totalorder %s205, 1
        %s210 = sphi %s193, %s193
        %s211 = sphi %s194, %s194
      $region126: #{gru4rec_forward.2} parent=122 // loop_header_branch
        %208 = sbr.rel (%p206) target = $region130
      $region127: #{gru4rec_forward.2} parent=122 // loop_body
        %v212 = vld [vmem:[%s210] sm:%s203]
        %213 = vst [vmem:[%s211] sm:%s203] %v212
      $region128: #{gru4rec_forward.2} parent=122 // loop_footer
        %s209 = sadd.s32 1, %s205
      $region129: #{gru4rec_forward.2} parent=122 // loop_footer_branch
        %204 = sbr.rel target = $region125
      $region130: #{gru4rec_forward.2} parent=122 // loop_exit
        _
    $region123: #{gru4rec_forward.2} parent=1 // pred_fallthru
      _
    // Predicated region
    $region142: #{gru4rec_forward.2} parent=1 // pred_check
      _
    $region143: #{gru4rec_forward.2} parent=1 // pred_check_branch
      %237 = sbr.rel (0) target = $region145
    $region144: #{gru4rec_forward.2} parent=1 // pred_region
      %238 = vsyncadd [#allocation3], 16
    $region145: #{gru4rec_forward.2} parent=1 // pred_fallthru
      _
    %s239 = sld [smem:[#allocation4 + $0x4]]
    %p240 = scmp.gt.s32.totalorder %s239, 0
    %s241 = scalar_select %p240, %s239, 0
    %p242 = scmp.lt.s32.totalorder %s241, 511
    %s243 = scalar_select %p242, %s241, 511
    %s244 = scalar_lea.vmem %s2, %s243
    %s245 = scalar_lea.vmem [#allocation2], 4
    %p247 = scmp.lt.u32.totalorder 1, 8
    %p248 = pneg %p247
    // Predicated region
    $region146: #{gru4rec_forward.2} parent=1 // pred_check
      _
    $region147: #{gru4rec_forward.2} parent=1 // pred_check_branch
      %250 = sbr.rel (%p247) target = $region149
    $region148: #{gru4rec_forward.2} parent=1 // pred_region
      %s265 = sand.u32 1, 7
      %p266 = scmp.eq.s32.totalorder %s265, 0
      %p267 = pneg %p266
      // Predicated region
      $region161: #{gru4rec_forward.2} parent=148 // pred_check
        _
      $region162: #{gru4rec_forward.2} parent=148 // pred_check_branch
        %269 = sbr.rel (%p266) target = $region164
      $region163: #{gru4rec_forward.2} parent=148 // pred_region
        %s270 = sand.u32 1, 7
        %s271 = ssub.s32 1, %s270
        %s272 = scalar_lea.vmem %s244, %s271
        %s273 = ssub.s32 1, %s270
        %s274 = scalar_lea.vmem %s245, %s273 [#allocation2]
        %s275 = sshllo.u32 0, %s270
        loop: start=0, step=1, limit=1
        $region165: #{gru4rec_forward.2} parent=163 // loop_pre_header
          _
        $region166: #{gru4rec_forward.2} parent=163 // loop_header
          %s277 = sphi 0, %s281
          %p278 = scmp.ge.s32.totalorder %s277, 1
          %s282 = sphi %s272, %s272
          %s283 = sphi %s274, %s274
        $region167: #{gru4rec_forward.2} parent=163 // loop_header_branch
          %280 = sbr.rel (%p278) target = $region171
        $region168: #{gru4rec_forward.2} parent=163 // loop_body
          %v284 = vld [vmem:[%s282] sm:%s275]
          %285 = vst [vmem:[%s283] sm:%s275] %v284
        $region169: #{gru4rec_forward.2} parent=163 // loop_footer
          %s281 = sadd.s32 1, %s277
        $region170: #{gru4rec_forward.2} parent=163 // loop_footer_branch
          %276 = sbr.rel target = $region166
        $region171: #{gru4rec_forward.2} parent=163 // loop_exit
          _
      $region164: #{gru4rec_forward.2} parent=148 // pred_fallthru
        _
    $region149: #{gru4rec_forward.2} parent=1 // pred_fallthru
      _
    // Predicated region
    $region150: #{gru4rec_forward.2} parent=1 // pred_check
      %p251 = pneg %p247
    $region151: #{gru4rec_forward.2} parent=1 // pred_check_branch
      %253 = sbr.rel (%p251) target = $region153
    $region152: #{gru4rec_forward.2} parent=1 // pred_region
      %s254 = sshllo.u32 0, 1
      loop: start=0, step=1, limit=1
      $region154: #{gru4rec_forward.2} parent=152 // loop_pre_header
        _
      $region155: #{gru4rec_forward.2} parent=152 // loop_header
        %s256 = sphi 0, %s260
        %p257 = scmp.ge.s32.totalorder %s256, 1
        %s261 = sphi %s244, %s244
        %s262 = sphi %s245, %s245
      $region156: #{gru4rec_forward.2} parent=152 // loop_header_branch
        %259 = sbr.rel (%p257) target = $region160
      $region157: #{gru4rec_forward.2} parent=152 // loop_body
        %v263 = vld [vmem:[%s261] sm:%s254]
        %264 = vst [vmem:[%s262] sm:%s254] %v263
      $region158: #{gru4rec_forward.2} parent=152 // loop_footer
        %s260 = sadd.s32 1, %s256
      $region159: #{gru4rec_forward.2} parent=152 // loop_footer_branch
        %255 = sbr.rel target = $region155
      $region160: #{gru4rec_forward.2} parent=152 // loop_exit
        _
    $region153: #{gru4rec_forward.2} parent=1 // pred_fallthru
      _
    // Predicated region
    $region172: #{gru4rec_forward.2} parent=1 // pred_check
      _
    $region173: #{gru4rec_forward.2} parent=1 // pred_check_branch
      %288 = sbr.rel (0) target = $region175
    $region174: #{gru4rec_forward.2} parent=1 // pred_region
      %289 = vsyncadd [#allocation3], 16
    $region175: #{gru4rec_forward.2} parent=1 // pred_fallthru
      _
    %s290 = sld [smem:[#allocation4 + $0x5]]
    %p291 = scmp.gt.s32.totalorder %s290, 0
    %s292 = scalar_select %p291, %s290, 0
    %p293 = scmp.lt.s32.totalorder %s292, 511
    %s294 = scalar_select %p293, %s292, 511
    %s295 = scalar_lea.vmem %s2, %s294
    %s296 = scalar_lea.vmem [#allocation2], 5
    %p298 = scmp.lt.u32.totalorder 1, 8
    %p299 = pneg %p298
    // Predicated region
    $region176: #{gru4rec_forward.2} parent=1 // pred_check
      _
    $region177: #{gru4rec_forward.2} parent=1 // pred_check_branch
      %301 = sbr.rel (%p298) target = $region179
    $region178: #{gru4rec_forward.2} parent=1 // pred_region
      %s316 = sand.u32 1, 7
      %p317 = scmp.eq.s32.totalorder %s316, 0
      %p318 = pneg %p317
      // Predicated region
      $region191: #{gru4rec_forward.2} parent=178 // pred_check
        _
      $region192: #{gru4rec_forward.2} parent=178 // pred_check_branch
        %320 = sbr.rel (%p317) target = $region194
      $region193: #{gru4rec_forward.2} parent=178 // pred_region
        %s321 = sand.u32 1, 7
        %s322 = ssub.s32 1, %s321
        %s323 = scalar_lea.vmem %s295, %s322
        %s324 = ssub.s32 1, %s321
        %s325 = scalar_lea.vmem %s296, %s324 [#allocation2]
        %s326 = sshllo.u32 0, %s321
        loop: start=0, step=1, limit=1
        $region195: #{gru4rec_forward.2} parent=193 // loop_pre_header
          _
        $region196: #{gru4rec_forward.2} parent=193 // loop_header
          %s328 = sphi 0, %s332
          %p329 = scmp.ge.s32.totalorder %s328, 1
          %s333 = sphi %s323, %s323
          %s334 = sphi %s325, %s325
        $region197: #{gru4rec_forward.2} parent=193 // loop_header_branch
          %331 = sbr.rel (%p329) target = $region201
        $region198: #{gru4rec_forward.2} parent=193 // loop_body
          %v335 = vld [vmem:[%s333] sm:%s326]
          %336 = vst [vmem:[%s334] sm:%s326] %v335
        $region199: #{gru4rec_forward.2} parent=193 // loop_footer
          %s332 = sadd.s32 1, %s328
        $region200: #{gru4rec_forward.2} parent=193 // loop_footer_branch
          %327 = sbr.rel target = $region196
        $region201: #{gru4rec_forward.2} parent=193 // loop_exit
          _
      $region194: #{gru4rec_forward.2} parent=178 // pred_fallthru
        _
    $region179: #{gru4rec_forward.2} parent=1 // pred_fallthru
      _
    // Predicated region
    $region180: #{gru4rec_forward.2} parent=1 // pred_check
      %p302 = pneg %p298
    $region181: #{gru4rec_forward.2} parent=1 // pred_check_branch
      %304 = sbr.rel (%p302) target = $region183
    $region182: #{gru4rec_forward.2} parent=1 // pred_region
      %s305 = sshllo.u32 0, 1
      loop: start=0, step=1, limit=1
      $region184: #{gru4rec_forward.2} parent=182 // loop_pre_header
        _
      $region185: #{gru4rec_forward.2} parent=182 // loop_header
        %s307 = sphi 0, %s311
        %p308 = scmp.ge.s32.totalorder %s307, 1
        %s312 = sphi %s295, %s295
        %s313 = sphi %s296, %s296
      $region186: #{gru4rec_forward.2} parent=182 // loop_header_branch
        %310 = sbr.rel (%p308) target = $region190
      $region187: #{gru4rec_forward.2} parent=182 // loop_body
        %v314 = vld [vmem:[%s312] sm:%s305]
        %315 = vst [vmem:[%s313] sm:%s305] %v314
      $region188: #{gru4rec_forward.2} parent=182 // loop_footer
        %s311 = sadd.s32 1, %s307
      $region189: #{gru4rec_forward.2} parent=182 // loop_footer_branch
        %306 = sbr.rel target = $region185
      $region190: #{gru4rec_forward.2} parent=182 // loop_exit
        _
    $region183: #{gru4rec_forward.2} parent=1 // pred_fallthru
      _
    // Predicated region
    $region202: #{gru4rec_forward.2} parent=1 // pred_check
      _
    $region203: #{gru4rec_forward.2} parent=1 // pred_check_branch
      %339 = sbr.rel (0) target = $region205
    $region204: #{gru4rec_forward.2} parent=1 // pred_region
      %340 = vsyncadd [#allocation3], 16
    $region205: #{gru4rec_forward.2} parent=1 // pred_fallthru
      _
    %s341 = sld [smem:[#allocation4 + $0x6]]
    %p342 = scmp.gt.s32.totalorder %s341, 0
    %s343 = scalar_select %p342, %s341, 0
    %p344 = scmp.lt.s32.totalorder %s343, 511
    %s345 = scalar_select %p344, %s343, 511
    %s346 = scalar_lea.vmem %s2, %s345
    %s347 = scalar_lea.vmem [#allocation2], 6
    %p349 = scmp.lt.u32.totalorder 1, 8
    %p350 = pneg %p349
    // Predicated region
    $region206: #{gru4rec_forward.2} parent=1 // pred_check
      _
    $region207: #{gru4rec_forward.2} parent=1 // pred_check_branch
      %352 = sbr.rel (%p349) target = $region209
    $region208: #{gru4rec_forward.2} parent=1 // pred_region
      %s367 = sand.u32 1, 7
      %p368 = scmp.eq.s32.totalorder %s367, 0
      %p369 = pneg %p368
      // Predicated region
      $region221: #{gru4rec_forward.2} parent=208 // pred_check
        _
      $region222: #{gru4rec_forward.2} parent=208 // pred_check_branch
        %371 = sbr.rel (%p368) target = $region224
      $region223: #{gru4rec_forward.2} parent=208 // pred_region
        %s372 = sand.u32 1, 7
        %s373 = ssub.s32 1, %s372
        %s374 = scalar_lea.vmem %s346, %s373
        %s375 = ssub.s32 1, %s372
        %s376 = scalar_lea.vmem %s347, %s375 [#allocation2]
        %s377 = sshllo.u32 0, %s372
        loop: start=0, step=1, limit=1
        $region225: #{gru4rec_forward.2} parent=223 // loop_pre_header
          _
        $region226: #{gru4rec_forward.2} parent=223 // loop_header
          %s379 = sphi 0, %s383
          %p380 = scmp.ge.s32.totalorder %s379, 1
          %s384 = sphi %s374, %s374
          %s385 = sphi %s376, %s376
        $region227: #{gru4rec_forward.2} parent=223 // loop_header_branch
          %382 = sbr.rel (%p380) target = $region231
        $region228: #{gru4rec_forward.2} parent=223 // loop_body
          %v386 = vld [vmem:[%s384] sm:%s377]
          %387 = vst [vmem:[%s385] sm:%s377] %v386
        $region229: #{gru4rec_forward.2} parent=223 // loop_footer
          %s383 = sadd.s32 1, %s379
        $region230: #{gru4rec_forward.2} parent=223 // loop_footer_branch
          %378 = sbr.rel target = $region226
        $region231: #{gru4rec_forward.2} parent=223 // loop_exit
          _
      $region224: #{gru4rec_forward.2} parent=208 // pred_fallthru
        _
    $region209: #{gru4rec_forward.2} parent=1 // pred_fallthru
      _
    // Predicated region
    $region210: #{gru4rec_forward.2} parent=1 // pred_check
      %p353 = pneg %p349
    $region211: #{gru4rec_forward.2} parent=1 // pred_check_branch
      %355 = sbr.rel (%p353) target = $region213
    $region212: #{gru4rec_forward.2} parent=1 // pred_region
      %s356 = sshllo.u32 0, 1
      loop: start=0, step=1, limit=1
      $region214: #{gru4rec_forward.2} parent=212 // loop_pre_header
        _
      $region215: #{gru4rec_forward.2} parent=212 // loop_header
        %s358 = sphi 0, %s362
        %p359 = scmp.ge.s32.totalorder %s358, 1
        %s363 = sphi %s346, %s346
        %s364 = sphi %s347, %s347
      $region216: #{gru4rec_forward.2} parent=212 // loop_header_branch
        %361 = sbr.rel (%p359) target = $region220
      $region217: #{gru4rec_forward.2} parent=212 // loop_body
        %v365 = vld [vmem:[%s363] sm:%s356]
        %366 = vst [vmem:[%s364] sm:%s356] %v365
      $region218: #{gru4rec_forward.2} parent=212 // loop_footer
        %s362 = sadd.s32 1, %s358
      $region219: #{gru4rec_forward.2} parent=212 // loop_footer_branch
        %357 = sbr.rel target = $region215
      $region220: #{gru4rec_forward.2} parent=212 // loop_exit
        _
    $region213: #{gru4rec_forward.2} parent=1 // pred_fallthru
      _
    // Predicated region
    $region232: #{gru4rec_forward.2} parent=1 // pred_check
      _
    $region233: #{gru4rec_forward.2} parent=1 // pred_check_branch
      %390 = sbr.rel (0) target = $region235
    $region234: #{gru4rec_forward.2} parent=1 // pred_region
      %391 = vsyncadd [#allocation3], 16
    $region235: #{gru4rec_forward.2} parent=1 // pred_fallthru
      _
    %s392 = sld [smem:[#allocation4 + $0x7]]
    %p393 = scmp.gt.s32.totalorder %s392, 0
    %s394 = scalar_select %p393, %s392, 0
    %p395 = scmp.lt.s32.totalorder %s394, 511
    %s396 = scalar_select %p395, %s394, 511
    %s397 = scalar_lea.vmem %s2, %s396
    %s398 = scalar_lea.vmem [#allocation2], 7
    %p400 = scmp.lt.u32.totalorder 1, 8
    %p401 = pneg %p400
    // Predicated region
    $region236: #{gru4rec_forward.2} parent=1 // pred_check
      _
    $region237: #{gru4rec_forward.2} parent=1 // pred_check_branch
      %403 = sbr.rel (%p400) target = $region239
    $region238: #{gru4rec_forward.2} parent=1 // pred_region
      %s418 = sand.u32 1, 7
      %p419 = scmp.eq.s32.totalorder %s418, 0
      %p420 = pneg %p419
      // Predicated region
      $region251: #{gru4rec_forward.2} parent=238 // pred_check
        _
      $region252: #{gru4rec_forward.2} parent=238 // pred_check_branch
        %422 = sbr.rel (%p419) target = $region254
      $region253: #{gru4rec_forward.2} parent=238 // pred_region
        %s423 = sand.u32 1, 7
        %s424 = ssub.s32 1, %s423
        %s425 = scalar_lea.vmem %s397, %s424
        %s426 = ssub.s32 1, %s423
        %s427 = scalar_lea.vmem %s398, %s426 [#allocation2]
        %s428 = sshllo.u32 0, %s423
        loop: start=0, step=1, limit=1
        $region255: #{gru4rec_forward.2} parent=253 // loop_pre_header
          _
        $region256: #{gru4rec_forward.2} parent=253 // loop_header
          %s430 = sphi 0, %s434
          %p431 = scmp.ge.s32.totalorder %s430, 1
          %s435 = sphi %s425, %s425
          %s436 = sphi %s427, %s427
        $region257: #{gru4rec_forward.2} parent=253 // loop_header_branch
          %433 = sbr.rel (%p431) target = $region261
        $region258: #{gru4rec_forward.2} parent=253 // loop_body
          %v437 = vld [vmem:[%s435] sm:%s428]
          %438 = vst [vmem:[%s436] sm:%s428] %v437
        $region259: #{gru4rec_forward.2} parent=253 // loop_footer
          %s434 = sadd.s32 1, %s430
        $region260: #{gru4rec_forward.2} parent=253 // loop_footer_branch
          %429 = sbr.rel target = $region256
        $region261: #{gru4rec_forward.2} parent=253 // loop_exit
          _
      $region254: #{gru4rec_forward.2} parent=238 // pred_fallthru
        _
    $region239: #{gru4rec_forward.2} parent=1 // pred_fallthru
      _
    // Predicated region
    $region240: #{gru4rec_forward.2} parent=1 // pred_check
      %p404 = pneg %p400
    $region241: #{gru4rec_forward.2} parent=1 // pred_check_branch
      %406 = sbr.rel (%p404) target = $region243
    $region242: #{gru4rec_forward.2} parent=1 // pred_region
      %s407 = sshllo.u32 0, 1
      loop: start=0, step=1, limit=1
      $region244: #{gru4rec_forward.2} parent=242 // loop_pre_header
        _
      $region245: #{gru4rec_forward.2} parent=242 // loop_header
        %s409 = sphi 0, %s413
        %p410 = scmp.ge.s32.totalorder %s409, 1
        %s414 = sphi %s397, %s397
        %s415 = sphi %s398, %s398
      $region246: #{gru4rec_forward.2} parent=242 // loop_header_branch
        %412 = sbr.rel (%p410) target = $region250
      $region247: #{gru4rec_forward.2} parent=242 // loop_body
        %v416 = vld [vmem:[%s414] sm:%s407]
        %417 = vst [vmem:[%s415] sm:%s407] %v416
      $region248: #{gru4rec_forward.2} parent=242 // loop_footer
        %s413 = sadd.s32 1, %s409
      $region249: #{gru4rec_forward.2} parent=242 // loop_footer_branch
        %408 = sbr.rel target = $region245
      $region250: #{gru4rec_forward.2} parent=242 // loop_exit
        _
    $region243: #{gru4rec_forward.2} parent=1 // pred_fallthru
      _
    // Predicated region
    $region262: #{gru4rec_forward.2} parent=1 // pred_check
      _
    $region263: #{gru4rec_forward.2} parent=1 // pred_check_branch
      %441 = sbr.rel (0) target = $region265
    $region264: #{gru4rec_forward.2} parent=1 // pred_region
      %442 = vsyncadd [#allocation3], 16
    $region265: #{gru4rec_forward.2} parent=1 // pred_fallthru
      _
    %v443 = vld [vmem:[%s1] sm:$0xff]
    %v444 = vld [vmem:[%s3] sm:$0xff]
    %v445 = vld [vmem:[%s3 + $0x8] sm:$0xff]
    %v446 = vld [vmem:[%s3 + $0x10] sm:$0xff]
    %v447 = vld [vmem:[%s3 + $0x18] sm:$0xff]
    %vm448 = vcmask 261120
    %v450 = vsel %vm448, %v443, 0
    %452 = vmatprep.subr.mxu0 0.0
    %453 = vmatpush1.msra.mxu0 %v444
    %454 = vmatprep.subr.mxu0 0.0
    %455 = vmatpush1.msra.mxu0 %v445
    %456 = vmatprep.subr.mxu0 0.0
    %457 = vmatpush1.msra.mxu0 %v446
    %458 = vmatprep.subr.mxu0 0.0
    %459 = vmatpush1.msra.mxu0 %v447
    %460 = vmatprep.subr.mxu0 0.0
    %461 = vmatpush1.msra.mxu0 0.0
    %462 = vmatprep.subr.mxu0 0.0
    %463 = vmatpush1.msra.mxu0 0.0
    %464 = vmatprep.subr.mxu0 0.0
    %465 = vmatpush1.msra.mxu0 0.0
    %466 = vmatprep.subr.mxu0 0.0
    %467 = vmatpush1.msra.mxu0 0.0
    %468 = vmatprep.subr.mxu0 0.0
    %469 = vmatpush1.msra.mxu0 0.0
    %470 = vmatprep.subr.mxu0 0.0
    %471 = vmatpush1.msra.mxu0 0.0
    %472 = vmatprep.subr.mxu0 0.0
    %473 = vmatpush1.msra.mxu0 0.0
    %474 = vmatprep.subr.mxu0 0.0
    %475 = vmatpush1.msra.mxu0 0.0
    %476 = vmatprep.subr.mxu0 0.0
    %477 = vmatpush1.msra.mxu0 0.0
    %478 = vmatprep.subr.mxu0 0.0
    %479 = vmatpush1.msra.mxu0 0.0
    %480 = vmatprep.subr.mxu0 0.0
    %481 = vmatpush1.msra.mxu0 0.0
    %482 = vmatprep.subr.mxu0 0.0
    %483 = vmatpush1.msra.mxu0 0.0
    %484 = vmatprep.subr.mxu0 0.0
    %485 = vmatpush1.msra.mxu0 0.0
    %486 = vmatprep.subr.mxu0 0.0
    %487 = vmatpush1.msra.mxu0 0.0
    %488 = vmatprep.subr.mxu0 0.0
    %489 = vmatpush1.msra.mxu0 0.0
    %490 = vmatprep.subr.mxu0 0.0
    %491 = vmatpush1.msra.mxu0 0.0
    %492 = vmatprep.subr.mxu0 0.0
    %493 = vmatpush1.msra.mxu0 0.0
    %494 = vmatprep.subr.mxu0 0.0
    %495 = vmatpush1.msra.mxu0 0.0
    %496 = vmatprep.subr.mxu0 0.0
    %497 = vmatpush1.msra.mxu0 0.0
    %498 = vmatprep.subr.mxu0 0.0
    %499 = vmatpush1.msra.mxu0 0.0
    %500 = vmatprep.subr.mxu0 0.0
    %501 = vmatpush1.msra.mxu0 0.0
    %502 = vmatprep.subr.mxu0 0.0
    %503 = vmatpush1.msra.mxu0 0.0
    %504 = vmatprep.subr.mxu0 0.0
    %505 = vmatpush1.msra.mxu0 0.0
    %506 = vmatprep.subr.mxu0 0.0
    %507 = vmatpush1.msra.mxu0 0.0
    %508 = vmatprep.subr.mxu0 0.0
    %509 = vmatpush1.msra.mxu0 0.0
    %510 = vmatprep.subr.mxu0 0.0
    %511 = vmatpush1.msra.mxu0 0.0
    %512 = vmatprep.subr.mxu0 0.0
    %513 = vmatpush1.msra.mxu0 0.0
    %514 = vmatprep.subr.mxu0 0.0
    %515 = vmatpush1.msra.mxu0 0.0
    %516 = vmatprep.mubr.f32.mxu0 0.0
    %517 = vmatmul.mubr.f32.gmra.mrb[0].mxu0 %v450
    %v518 = vpop.f32.mrb[0].mxu0
    %v519 = vadd.f32 0.0, %v518
    %v520 = vpop.f32.mrb[0].mxu0
    %521 = vdwg.mxu0
    %s522 = smul.u32 1, 1
    %s523 = sshll.u32 %s522, 4
    %524 = dma.done [#allocation3], %s523
    %s525 = sshll.u32 %s522, 4
    %526 = dma.done [#allocation3], %s525
    %s527 = sshll.u32 %s522, 4
    %528 = dma.done [#allocation3], %s527
    %s529 = sshll.u32 %s522, 4
    %530 = dma.done [#allocation3], %s529
    %s531 = sshll.u32 %s522, 4
    %532 = dma.done [#allocation3], %s531
    %s533 = sshll.u32 %s522, 4
    %534 = dma.done [#allocation3], %s533
    %s535 = sshll.u32 %s522, 4
    %536 = dma.done [#allocation3], %s535
    %s537 = sshll.u32 %s522, 4
    %538 = dma.done [#allocation3], %s537
    %v539 = vld [vmem:[#allocation2] sm:$0xff]
    %v540 = vld [vmem:[%s4] sm:$0x1]
    %v542 = vlaneseq
    %v543 = vshrl.u32 %v542, 7
    %v544 = vsub.s32 0, %v543
    %v545 = vrot.slane %v540, %v544
    %v547 = vadd.f32 %v539, %v545
    %v548 = vadd.f32 %v547, %v519
    %v549 = vxor.u32 %v548, 2147483648
    %v550 = vmul.f32 %v549, 1.442695
    %v551 = vpow.pop %v550
    %v552 = vadd.f32 %v551, 1.0
    %v553 = vrcp.pop %v552
    %v554 = vmul.f32 1.0, %v553
    %v555 = vld [vmem:[%s5] sm:$0x1]
    %v557 = vlaneseq
    %v558 = vshrl.u32 %v557, 7
    %v559 = vsub.s32 0, %v558
    %v560 = vrot.slane %v555, %v559
    %561 = vrot.lane.b32.xlu0 %v560, 64
    %v562 = vpop.permute.xlu0 %561
    %v564 = vadd.f32 %v519, %v562
    %566 = vrot.lane.b32.xlu0 %v564, 64
    %v567 = vpop.permute.xlu0 %566
    %v569 = vmul.f32 %v554, %v567
    %571 = vrot.lane.b32.xlu0 %v569, 64
    %v572 = vpop.permute.xlu0 %571
    %v574 = vadd.f32 %v547, %v572
    %v575 = vtanh.pop %v574
    %v576 = vsub.f32 1.0, %v554
    %578 = vrot.lane.b32.xlu0 %v575, 96
    %v579 = vpop.permute.xlu0 %578
    %v581 = vmul.f32 %v576, %v579
    %582 = vrot.lane.b32.xlu0 %v443, 32
    %v583 = vpop.permute.xlu0 %582
    %v585 = vmul.f32 %v554, %v583
    %v586 = vadd.f32 %v581, %v585
    %588 = vrot.lane.b32.xlu0 %v586, 96
    %v589 = vpop.permute.xlu0 %588
    %591 = vst.msk [vmem:[%s6] sm:$0xff] %vm448, %v589
    %v592 = vpack.c.bf16 %v586, %v586
    %v594 = vunpack.c.l.b16 %v592
    %v595 = vpack.c.b16 %v594, %v594
    %596 = vrot.lane.b32.xlu0 %v595, 96
    %v597 = vpop.permute.xlu0 %596
    %vm599 = vcmask 257024
    %600 = vst.msk [vmem:[%s7] sm:$0xf] %vm599, %v597
    // Predicated region
    $region266: #{gru4rec_forward.2} parent=1 // pred_check
      _
    $region267: #{gru4rec_forward.2} parent=1 // pred_check_branch
      %602 = sbr.rel (0) target = $region269
    $region268: #{gru4rec_forward.2} parent=1 // pred_region
      _
    $region269: #{gru4rec_forward.2} parent=1 // pred_fallthru
      _
    // Predicated region
    $region270: #{gru4rec_forward.2} parent=1 // pred_check
      _
    $region271: #{gru4rec_forward.2} parent=1 // pred_check_branch
      %604 = sbr.rel (0) target = $region273
    $region272: #{gru4rec_forward.2} parent=1 // pred_region
      _
    $region273: #{gru4rec_forward.2} parent=1 // pred_fallthru
      _
    // Predicated region
    $region274: #{gru4rec_forward.2} parent=1 // pred_check
      _
    $region275: #{gru4rec_forward.2} parent=1 // pred_check_branch
      %606 = sbr.rel (0) target = $region277
    $region276: #{gru4rec_forward.2} parent=1 // pred_region
      _
    $region277: #{gru4rec_forward.2} parent=1 // pred_fallthru
      _
    // Predicated region
    $region278: #{gru4rec_forward.2} parent=1 // pred_check
      _
    $region279: #{gru4rec_forward.2} parent=1 // pred_check_branch
      %608 = sbr.rel (0) target = $region281
    $region280: #{gru4rec_forward.2} parent=1 // pred_region
      _
    $region281: #{gru4rec_forward.2} parent=1 // pred_fallthru
      _
    %609 = vsyncpa [#allocation5], 1
  %610 = vsyncmov [#allocation3]
  %s611 = vpop.sfrf %610
  %p612 = scmp.eq.s32.totalorder %s611, 0
  %p613 = pneg %p612
  %615 = shalt.err (%p613)

// kernel: gru4rec_forward.3
$region0: #{gru4rec_forward.3}
  #allocation0 [shape = 'u32[]', space=smem, size = 0x4, offset = 0x4, fixed_abs, tag = 'smem constant byte address 0x4 - core index']
  #allocation1 [shape = 'u32[144,128]{1,0:T(1,128)}', space=vmem, size = 0x12000, scoped, tag = 'internal scratch']
  %s0 = inlined_call_operand.vmem [shape: bf16[8,32], index: 0, kind: input, shape index: {}]
  %s1 = inlined_call_operand.vmem [shape: bf16[32,512], index: 1, kind: input, shape index: {}]
  %s2 = inlined_call_operand.vmem [shape: f32[1,512], index: 2, kind: input, shape index: {}]
  %s3 = inlined_call_operand.hbm [shape: f32[8,512], index: 3, kind: output, shape index: {}]
  %s4 = sld [smem:[#allocation0]]
  $region83: #{gru4rec_forward.3} parent=0
    _
  %s6 = ssub.s32 1, %s4
  %s7 = scalar_select 0, %s6, %s4
  $region1: #{gru4rec_forward.3} parent=0
    #allocation2 [shape = 'u8[32768]{0}', space=vmem, size = 0x8000, scoped, tag = 'input window, operand 1']
    #allocation3 [shape = 'u8[16384]{0}', space=vmem, size = 0x4000, scoped, tag = 'output window, operand 0']
    #allocation4 [shape = 's32[2]{0}', space=sflag, size = 0x8, scoped, tag = 'scoped memory for gru4rec_forward.3']
    %8 = vsyncpa [#allocation4], 0
    %s9 = scalar_lea.sflag [#allocation4], 1
    %10 = vsyncpa %s9, 0
    loop: start=0, step=1, limit=4
    $region2: #{gru4rec_forward.3} parent=1 // loop_pre_header
      _
    $region3: #{gru4rec_forward.3} parent=1 // loop_header
      %s12 = sphi 0, %s16
      %p13 = scmp.ge.s32.totalorder %s12, 4
      %s20 = sphi 0, %s20
      %s22 = sphi 0, %s20
      %s23 = sphi 0, %s22
      %s37 = sphi 0, %s23
      %s43 = sphi 0, %s45
      %s46 = sphi 0, %s43
      %s47 = sphi 0, %s46
      %s63 = sphi 0, %s47
      %s69 = sphi 0, %s71
      %s72 = sphi 0, %s69
      %s73 = sphi 0, %s72
      %s89 = sphi 0, %s73
      %s95 = sphi 0, %s97
      %s98 = sphi 0, %s95
      %s99 = sphi 0, %s98
      %s115 = sphi 0, %s99
    $region4: #{gru4rec_forward.3} parent=1 // loop_header_branch
      %15 = sbr.rel (%p13) target = $region8
    $region5: #{gru4rec_forward.3} parent=1 // loop_body
      %s17 = ssub.s32 %s12, 1
      %s18 = ssub.s32 %s12, 2
      %s19 = sadd.s32 %s12, 1
      %s21 = sadd.s32 %s20, 1
      %p24 = scmp.eq.s32.totalorder %s12, 1
      %p25 = scmp.ne.s32.totalorder %s20, %s22
      %p26 = scmp.eq.s32.totalorder %s12, 0
      %p27 = por %p25, %p26
      %p28 = scmp.ne.s32.totalorder %s20, %s22
      %p29 = scmp.eq.s32.totalorder %s17, 1
      %p30 = por %p28, %p29
      %p31 = scmp.ne.s32.totalorder %s22, %s23
      %p32 = scmp.eq.s32.totalorder %s17, 0
      %p33 = por %p31, %p32
      %p34 = scmp.ne.s32.totalorder %s22, %s23
      %p35 = scmp.eq.s32.totalorder %s18, 1
      %p36 = por %p34, %p35
      %p38 = scmp.ne.s32.totalorder %s23, %s37
      %p39 = scmp.eq.s32.totalorder %s18, 0
      %p40 = por %p38, %p39
      %s41 = ssub.s32 %s12, %s19
      %p42 = scmp.eq.s32.totalorder %s41, 0
      %s44 = sadd.s32 %s43, 1
      %s45 = scalar_select %p42, %s43, %s44
      %p48 = pneg %p42
      %p49 = scmp.eq.s32.totalorder %s12, 1
      %p50 = por %p48, %p49
      %p51 = scmp.ne.s32.totalorder %s43, %s46
      %p52 = scmp.eq.s32.totalorder %s12, 0
      %p53 = por %p51, %p52
      %p54 = scmp.ne.s32.totalorder %s43, %s46
      %p55 = scmp.eq.s32.totalorder %s17, 1
      %p56 = por %p54, %p55
      %p57 = scmp.ne.s32.totalorder %s46, %s47
      %p58 = scmp.eq.s32.totalorder %s17, 0
      %p59 = por %p57, %p58
      %p60 = scmp.ne.s32.totalorder %s46, %s47
      %p61 = scmp.eq.s32.totalorder %s18, 1
      %p62 = por %p60, %p61
      %p64 = scmp.ne.s32.totalorder %s47, %s63
      %p65 = scmp.eq.s32.totalorder %s18, 0
      %p66 = por %p64, %p65
      %s67 = ssub.s32 %s12, %s19
      %p68 = scmp.eq.s32.totalorder %s67, 0
      %s70 = sadd.s32 %s69, 1
      %s71 = scalar_select %p68, %s69, %s70
      %p74 = pneg %p68
      %p75 = scmp.eq.s32.totalorder %s12, 1
      %p76 = por %p74, %p75
      %p77 = scmp.ne.s32.totalorder %s69, %s72
      %p78 = scmp.eq.s32.totalorder %s12, 0
      %p79 = por %p77, %p78
      %p80 = scmp.ne.s32.totalorder %s69, %s72
      %p81 = scmp.eq.s32.totalorder %s17, 1
      %p82 = por %p80, %p81
      %p83 = scmp.ne.s32.totalorder %s72, %s73
      %p84 = scmp.eq.s32.totalorder %s17, 0
      %p85 = por %p83, %p84
      %p86 = scmp.ne.s32.totalorder %s72, %s73
      %p87 = scmp.eq.s32.totalorder %s18, 1
      %p88 = por %p86, %p87
      %p90 = scmp.ne.s32.totalorder %s73, %s89
      %p91 = scmp.eq.s32.totalorder %s18, 0
      %p92 = por %p90, %p91
      %s93 = ssub.s32 %s12, %s19
      %p94 = scmp.eq.s32.totalorder %s93, 0
      %s96 = sadd.s32 %s95, 1
      %s97 = scalar_select %p94, %s95, %s96
      %p100 = pneg %p94
      %p101 = scmp.eq.s32.totalorder %s12, 1
      %p102 = por %p100, %p101
      %p103 = scmp.ne.s32.totalorder %s95, %s98
      %p104 = scmp.eq.s32.totalorder %s12, 0
      %p105 = por %p103, %p104
      %p106 = scmp.ne.s32.totalorder %s95, %s98
      %p107 = scmp.eq.s32.totalorder %s17, 1
      %p108 = por %p106, %p107
      %p109 = scmp.ne.s32.totalorder %s98, %s99
      %p110 = scmp.eq.s32.totalorder %s17, 0
      %p111 = por %p109, %p110
      %p112 = scmp.ne.s32.totalorder %s98, %s99
      %p113 = scmp.eq.s32.totalorder %s18, 1
      %p114 = por %p112, %p113
      %p116 = scmp.ne.s32.totalorder %s99, %s115
      %p117 = scmp.eq.s32.totalorder %s18, 0
      %p118 = por %p116, %p117
      %p119 = scmp.le.s32.totalorder 1, %s12
      %p120 = scmp.lt.s32.totalorder %s12, 3
      %p121 = pnand %p119, %p120
      %p122 = pneg %p121
      // Predicated region
      $region9: #{gru4rec_forward.3} parent=5 // pred_check
        _
      $region10: #{gru4rec_forward.3} parent=5 // pred_check_branch
        %124 = sbr.rel (%p121) target = $region12
      $region11: #{gru4rec_forward.3} parent=5 // pred_region
        %s125 = ssub.s32 %s12, 1
        // Predicated region
        $region13: #{gru4rec_forward.3} parent=11 // pred_check
          %p126 = pneg %p33
        $region14: #{gru4rec_forward.3} parent=11 // pred_check_branch
          %128 = sbr.rel (%p126) target = $region16
        $region15: #{gru4rec_forward.3} parent=11 // pred_region
          _
        $region16: #{gru4rec_forward.3} parent=11 // pred_fallthru
          _
      $region12: #{gru4rec_forward.3} parent=5 // pred_fallthru
        _
      %p129 = scmp.lt.s32.totalorder %s12, 2
      // Predicated region
      $region17: #{gru4rec_forward.3} parent=5 // pred_check
        %p130 = pneg %p129
      $region18: #{gru4rec_forward.3} parent=5 // pred_check_branch
        %132 = sbr.rel (%p130) target = $region20
      $region19: #{gru4rec_forward.3} parent=5 // pred_region
        // Predicated region
        $region21: #{gru4rec_forward.3} parent=19 // pred_check
          %p133 = pneg %p53
        $region22: #{gru4rec_forward.3} parent=19 // pred_check_branch
          %135 = sbr.rel (%p133) target = $region24
        $region23: #{gru4rec_forward.3} parent=19 // pred_region
          %s136 = sand.u32 %s43, 1
          %s137 = sand.u32 %s43, 1
          %s138 = smul.addr %s137, 32
          %s139 = scalar_lea.vmem [#allocation2], %s138
          %s140 = smul.u32 2, %s12
          %s141 = smul.addr %s140, 4
          %s142 = scalar_lea.vmem %s1, %s141
          // Predicated region
          $region25: #{gru4rec_forward.3} parent=23 // pred_check
            _
          $region26: #{gru4rec_forward.3} parent=23 // pred_check_branch
            %144 = sbr.rel (0) target = $region28
          $region27: #{gru4rec_forward.3} parent=23 // pred_region
            // Predicated region
            $region29: #{gru4rec_forward.3} parent=27 // pred_check
              _
            $region30: #{gru4rec_forward.3} parent=27 // pred_check_branch
              %146 = sbr.rel (0) target = $region32
            $region31: #{gru4rec_forward.3} parent=27 // pred_region
              // Predicated region
              $region44: #{gru4rec_forward.3} parent=31 // pred_check
                _
              $region45: #{gru4rec_forward.3} parent=31 // pred_check_branch
                %167 = sbr.rel (0) target = $region47
              $region46: #{gru4rec_forward.3} parent=31 // pred_region
                loop: start=0, step=1, limit=1
                $region48: #{gru4rec_forward.3} parent=46 // loop_pre_header
                  _
                $region49: #{gru4rec_forward.3} parent=46 // loop_header
                  %s169 = sphi 0, %s173
                  %p170 = scmp.ge.s32.totalorder %s169, 1
                  %s174 = sphi %s142, %s142
                  %s175 = sphi %s139, %s139
                $region50: #{gru4rec_forward.3} parent=46 // loop_header_branch
                  %172 = sbr.rel (%p170) target = $region54
                $region51: #{gru4rec_forward.3} parent=46 // loop_body
                  %v176 = vld [vmem:[%s174] sm:$0xff]
                  %177 = vst [vmem:[%s175] sm:$0xff] %v176
                  %v178 = vld [vmem:[%s174 + $0x10] sm:$0xff]
                  %179 = vst [vmem:[%s175 + $0x8] sm:$0xff] %v178
                  %v180 = vld [vmem:[%s174 + $0x20] sm:$0xff]
                  %181 = vst [vmem:[%s175 + $0x10] sm:$0xff] %v180
                  %v182 = vld [vmem:[%s174 + $0x30] sm:$0xff]
                  %183 = vst [vmem:[%s175 + $0x18] sm:$0xff] %v182
                $region52: #{gru4rec_forward.3} parent=46 // loop_footer
                  %s173 = sadd.s32 1, %s169
                $region53: #{gru4rec_forward.3} parent=46 // loop_footer_branch
                  %168 = sbr.rel target = $region49
                $region54: #{gru4rec_forward.3} parent=46 // loop_exit
                  _
              $region47: #{gru4rec_forward.3} parent=31 // pred_fallthru
                _
              // Predicated region
              $region55: #{gru4rec_forward.3} parent=31 // pred_check
                _
              $region56: #{gru4rec_forward.3} parent=31 // pred_check_branch
                %185 = sbr.rel target = $region58
              $region57: #{gru4rec_forward.3} parent=31 // pred_region
                _
              $region58: #{gru4rec_forward.3} parent=31 // pred_fallthru
                _
            $region32: #{gru4rec_forward.3} parent=27 // pred_fallthru
              _
            // Predicated region
            $region33: #{gru4rec_forward.3} parent=27 // pred_check
              _
            $region34: #{gru4rec_forward.3} parent=27 // pred_check_branch
              %148 = sbr.rel target = $region36
            $region35: #{gru4rec_forward.3} parent=27 // pred_region
              loop: start=0, step=1, limit=1
              $region37: #{gru4rec_forward.3} parent=35 // loop_pre_header
                _
              $region38: #{gru4rec_forward.3} parent=35 // loop_header
                %s151 = sphi 0, %s155
                %p152 = scmp.ge.s32.totalorder %s151, 1
                %s156 = sphi %s142, %s142
                %s157 = sphi %s139, %s139
              $region39: #{gru4rec_forward.3} parent=35 // loop_header_branch
                %154 = sbr.rel (%p152) target = $region43
              $region40: #{gru4rec_forward.3} parent=35 // loop_body
                %v158 = vld [vmem:[%s156] sm:$0xff]
                %159 = vst [vmem:[%s157] sm:$0xff] %v158
                %v160 = vld [vmem:[%s156 + $0x10] sm:$0xff]
                %161 = vst [vmem:[%s157 + $0x8] sm:$0xff] %v160
                %v162 = vld [vmem:[%s156 + $0x20] sm:$0xff]
                %163 = vst [vmem:[%s157 + $0x10] sm:$0xff] %v162
                %v164 = vld [vmem:[%s156 + $0x30] sm:$0xff]
                %165 = vst [vmem:[%s157 + $0x18] sm:$0xff] %v164
              $region41: #{gru4rec_forward.3} parent=35 // loop_footer
                %s155 = sadd.s32 1, %s151
              $region42: #{gru4rec_forward.3} parent=35 // loop_footer_branch
                %150 = sbr.rel target = $region38
              $region43: #{gru4rec_forward.3} parent=35 // loop_exit
                _
            $region36: #{gru4rec_forward.3} parent=27 // pred_fallthru
              _
          $region28: #{gru4rec_forward.3} parent=23 // pred_fallthru
            _
          %186 = vnop
        $region24: #{gru4rec_forward.3} parent=19 // pred_fallthru
          _
        // Predicated region
        $region59: #{gru4rec_forward.3} parent=19 // pred_check
          %p187 = pneg %p79
        $region60: #{gru4rec_forward.3} parent=19 // pred_check_branch
          %189 = sbr.rel (%p187) target = $region62
        $region61: #{gru4rec_forward.3} parent=19 // pred_region
          %s190 = smul.u32 2, %s12
          %p191 = scmp.lt.s32.totalorder %s190, 3
          %s192 = scalar_select %p191, %s190, 3
          %s193 = scalar_lea.vmem %s2, %s192
          %s194 = smul.u32 2, %s12
        $region62: #{gru4rec_forward.3} parent=19 // pred_fallthru
          _
      $region20: #{gru4rec_forward.3} parent=5 // pred_fallthru
        _
      %p195 = scmp.le.s32.totalorder 1, %s12
      %p196 = scmp.lt.s32.totalorder %s12, 3
      %p197 = pnand %p195, %p196
      %p198 = pneg %p197
      // Predicated region
      $region63: #{gru4rec_forward.3} parent=5 // pred_check
        _
      $region64: #{gru4rec_forward.3} parent=5 // pred_check_branch
        %200 = sbr.rel (%p197) target = $region66
      $region65: #{gru4rec_forward.3} parent=5 // pred_region
        %s201 = ssub.s32 %s12, 1
        %s202 = sand.u32 %s46, 1
        %s203 = sand.u32 %s46, 1
        %s204 = smul.addr %s203, 32
        %s205 = scalar_lea.vmem [#allocation2], %s204
        // Predicated region
        $region67: #{gru4rec_forward.3} parent=65 // pred_check
          %p206 = pneg %p59
        $region68: #{gru4rec_forward.3} parent=65 // pred_check_branch
          %208 = sbr.rel (%p206) target = $region70
        $region69: #{gru4rec_forward.3} parent=65 // pred_region
          _
        $region70: #{gru4rec_forward.3} parent=65 // pred_fallthru
          _
        %p209 = pneg %p33
        %p210 = pneg %p30
        %s211 = sand.u32 %s46, 1
        %s212 = sand.u32 %s46, 1
        %s213 = smul.addr %s212, 32
        %s214 = scalar_lea.vmem [#allocation2], %s213
        %p215 = pneg %p59
        %p216 = pneg %p56
        %s217 = smul.u32 2, %s17
        %p218 = scmp.lt.s32.totalorder %s217, 3
        %s219 = scalar_select %p218, %s217, 3
        %s220 = scalar_lea.vmem %s2, %s219
        %p221 = pneg %p85
        %p222 = pneg %p82
        %p223 = pneg %p111
        %p224 = pneg %p108
        %s225 = sand.u32 %s98, 1
        %s226 = scalar_lea.sflag [#allocation4], %s225
        %s227 = sand.u32 %s98, 1
        %s228 = smul.addr %s227, 16
        %s229 = scalar_lea.vmem [#allocation3], %s228
        %s230 = smul.u32 2, %s17
        %s231 = smul.u32 2, %s17
        %p232 = scmp.lt.s32.totalorder %s231, 3
        %s233 = scalar_select %p232, %s231, 3
        %s234 = scalar_lea.vmem %s2, %s233
        %s235 = smul.u32 2, %s17
        %s236 = smul.u32 2, %s17
        %v238 = vld [vmem:[%s0] sm:$0xf]
        %v239 = vld [vmem:[%s205] sm:$0xff]
        %v240 = vld [vmem:[%s205 + $0x8] sm:$0xff]
        %v241 = vld [vmem:[%s205 + $0x10] sm:$0xff]
        %v242 = vld [vmem:[%s205 + $0x18] sm:$0xff]
        %v243 = vld [vmem:[%s234] sm:$0x3]
        %v245 = vlaneseq
        %v246 = vshrl.u32 %v245, 7
        %v247 = vsub.s32 0, %v246
        %v248 = vrot.slane %v243, %v247
        %v249 = vlaneseq
        %v250 = vshrl.u32 %v249, 7
        %v251 = vsub.s32 1, %v250
        %v252 = vrot.slane %v243, %v251
        %v259 = vunpack.c.l.b16 %v239
        %v260 = vunpack.c.h.b16 %v239
        %v261 = vunpack.c.l.b16 %v240
        %v262 = vunpack.c.h.b16 %v240
        %v263 = vunpack.c.l.b16 %v241
        %v264 = vunpack.c.h.b16 %v241
        %v265 = vunpack.c.l.b16 %v242
        %v266 = vunpack.c.h.b16 %v242
        %v267 = vpack.c.b16 %v261, %v259
        %v268 = vpack.c.b16 %v262, %v260
        %v269 = vpack.c.b16 %v265, %v263
        %v270 = vpack.c.b16 %v266, %v264
        %vm275 = vcmask 261120
        %v277 = vsel %vm275, %v238, 0
        %279 = vmatprep.subr.bf16.mxu0 %v268
        %280 = vmatpush1.bf16.msra.mxu0 %v267
        %281 = vmatprep.subr.bf16.mxu0 %v270
        %282 = vmatpush1.bf16.msra.mxu0 %v269
        %283 = vmatprep.subr.bf16.mxu0 0
        %284 = vmatpush1.bf16.msra.mxu0 0
        %285 = vmatprep.subr.bf16.mxu0 0
        %286 = vmatpush1.bf16.msra.mxu0 0
        %287 = vmatprep.subr.bf16.mxu0 0
        %288 = vmatpush1.bf16.msra.mxu0 0
        %289 = vmatprep.subr.bf16.mxu0 0
        %290 = vmatpush1.bf16.msra.mxu0 0
        %291 = vmatprep.subr.bf16.mxu0 0
        %292 = vmatpush1.bf16.msra.mxu0 0
        %293 = vmatprep.subr.bf16.mxu0 0
        %294 = vmatpush1.bf16.msra.mxu0 0
        %295 = vmatprep.subr.bf16.mxu0 0
        %296 = vmatpush1.bf16.msra.mxu0 0
        %297 = vmatprep.subr.bf16.mxu0 0
        %298 = vmatpush1.bf16.msra.mxu0 0
        %299 = vmatprep.subr.bf16.mxu0 0
        %300 = vmatpush1.bf16.msra.mxu0 0
        %301 = vmatprep.subr.bf16.mxu0 0
        %302 = vmatpush1.bf16.msra.mxu0 0
        %303 = vmatprep.subr.bf16.mxu0 0
        %304 = vmatpush1.bf16.msra.mxu0 0
        %305 = vmatprep.subr.bf16.mxu0 0
        %306 = vmatpush1.bf16.msra.mxu0 0
        %307 = vmatprep.subr.bf16.mxu0 0
        %308 = vmatpush1.bf16.msra.mxu0 0
        %309 = vmatprep.subr.bf16.mxu0 0
        %310 = vmatpush1.bf16.msra.mxu0 0
        %311 = vmatprep.mubr.bf16.mxu0 0
        %312 = vmatmul.mubr.bf16.gmra.mrb[0].mxu0 %v277
        %v313 = vpop.f32.mrb[0].mxu0
        %v314 = vadd.f32 %v248, %v313
        %v315 = vpop.f32.mrb[0].mxu0
        %v316 = vadd.f32 %v252, %v315
        %v317 = vpop.f32.mrb[0].mxu0
        %v318 = vpop.f32.mrb[0].mxu0
        %319 = vdwg.mxu0
        %v320 = vtanh.pop %v314
        %v321 = vtanh.pop %v316
        %322 = vst [vmem:[%s229] sm:$0xff] %v320
        %323 = vst [vmem:[%s229 + $0x8] sm:$0xff] %v321
        %s324 = sand.u32 %s98, 1
        %s325 = scalar_lea.sflag [#allocation4], %s324
        %s326 = sand.u32 %s98, 1
        %s327 = smul.addr %s326, 16
        %s328 = scalar_lea.vmem [#allocation3], %s327
        // Predicated region
        $region71: #{gru4rec_forward.3} parent=65 // pred_check
          %p329 = pneg %p108
        $region72: #{gru4rec_forward.3} parent=65 // pred_check_branch
          %331 = sbr.rel (%p329) target = $region74
        $region73: #{gru4rec_forward.3} parent=65 // pred_region
          %s332 = smul.u32 2, %s17
          %s334 = ssub.s32 256, 256
          %335 = vsyncadd %s325, %s334
          %s336 = smul.addr %s332, 128
          %s337 = scalar_lea.hbm %s3, %s336
          %s339 = sshll.u32 %s328, 4
          %s340 = int_to_ptr.vmem [resolvable:$true] %s339
          %342 = dma.vmem_to_hbm [thread:$0]  %s340, 256, %s337, %s325
        $region74: #{gru4rec_forward.3} parent=65 // pred_fallthru
          _
      $region66: #{gru4rec_forward.3} parent=5 // pred_fallthru
        _
      %p343 = scmp.le.s32.totalorder 2, %s12
      // Predicated region
      $region75: #{gru4rec_forward.3} parent=5 // pred_check
        %p344 = pneg %p343
      $region76: #{gru4rec_forward.3} parent=5 // pred_check_branch
        %346 = sbr.rel (%p344) target = $region78
      $region77: #{gru4rec_forward.3} parent=5 // pred_region
        %s347 = ssub.s32 %s12, 2
        // Predicated region
        $region79: #{gru4rec_forward.3} parent=77 // pred_check
          %p348 = pneg %p114
        $region80: #{gru4rec_forward.3} parent=77 // pred_check_branch
          %350 = sbr.rel (%p348) target = $region82
        $region81: #{gru4rec_forward.3} parent=77 // pred_region
          %s351 = sand.u32 %s99, 1
          %s352 = scalar_lea.sflag [#allocation4], %s351
          %s353 = sand.u32 %s99, 1
          %s354 = smul.addr %s353, 16
          %s355 = scalar_lea.vmem [#allocation3], %s354
          %356 = dma.done %s352, 256
        $region82: #{gru4rec_forward.3} parent=77 // pred_fallthru
          _
      $region78: #{gru4rec_forward.3} parent=5 // pred_fallthru
        _
    $region6: #{gru4rec_forward.3} parent=1 // loop_footer
      %s16 = sadd.s32 1, %s12
    $region7: #{gru4rec_forward.3} parent=1 // loop_footer_branch
      %11 = sbr.rel target = $region3
    $region8: #{gru4rec_forward.3} parent=1 // loop_exit
      _
    %357 = vsyncpa [#allocation4], 1
    %s358 = scalar_lea.sflag [#allocation4], 1
    %359 = vsyncpa %s358, 1

</llo_original>
